<compile_context>
chip_gen: v7x
topology: tpu7x:2x2x1
jax: 0.10.0
libtpu: 0.0.40
codegen_flags: <defaults>
</compile_context>

<pallas_src>
import functools

import jax
import jax.numpy as jnp
from jax.experimental import pallas as pl
from jax.experimental.pallas import tpu as pltpu

_MiB = 1024 * 1024
# Resident MLP params, double-buffered by the pipeline (f32).
_PARAM_VMEM_BYTES = 2 * 4 * (512 * 256 + 256 + 256 * 128 + 128
                             + 128 * 64 + 64 + 64 * 1 + 1)


def _round_down(x, m):
    return (x // m) * m


def _round_up(x, m):
    return ((x + m - 1) // m) * m


def _vmem_capacity_bytes():
    try:
        info = pltpu.get_tpu_info()
        cap = getattr(info, "vmem_capacity_bytes", None)
        if cap:
            return int(cap)
    except Exception:
        pass
    return 64 * _MiB  # conservative fallback (v7x physical VMEM)


def _choose_tiles(B, C, HW, itemsize, vmem_target):
    """Pick (b_tile, hw_tile).

    VMEM model per step (bytes):
        2 * b*C*hw_pad*itemsize     c5 block, double-buffered
      + 4 * b*C*128*4               f32 lane-accumulator + chunk/mask temps
      + params (double-buffered) + misc
    """
    usable = max(vmem_target - _PARAM_VMEM_BYTES - 2 * _MiB, 4 * _MiB)

    # 1) hw_tile first: longest contiguous DMA rows, assuming the minimum
    #    b tile, capped so the unrolled chunk loop stays small.
    b_min = min(B, 8)
    fixed_b = 4 * 128 * 4 * b_min * C
    per_lane = 2 * itemsize * b_min * C
    max_lanes = (usable - fixed_b) // per_lane
    max_lanes = max(128, _round_down(max_lanes, 128))
    max_lanes = min(max_lanes, 4096)
    if HW <= max_lanes:
        hw_tile = HW                       # whole spatial extent, single k step
    else:
        hw_tile = max_lanes                # multiple of 128; tail masked in-kernel
    hw_pad = _round_up(hw_tile, 128)

    # 2) b_tile second: fill the remaining budget (divisor of B, multiple of 8
    #    where possible so the (b_tile, 1) output block stays layout-friendly).
    per_b = C * (2 * hw_pad * itemsize + 4 * 128 * 4)
    b_cap = max(1, usable // per_b)
    cands = [d for d in range(1, B + 1)
             if B % d == 0 and d <= b_cap and (d % 8 == 0 or d == B)]
    if not cands:
        cands = [d for d in range(1, B + 1) if B % d == 0 and d <= b_cap]
    b_tile = max(cands) if cands else B

    # v7x megacore: keep >= 2 B-blocks when it is cheap to do so
    # (harmless on single-TC v5e/v6e).
    if B // b_tile < 2 and B >= 16 and (b_tile // 2) % 8 == 0:
        b_tile //= 2

    return b_tile, hw_tile


def _mlp_head(x, w1_ref, b1_ref, w2_ref, b2_ref, w3_ref, b3_ref, w4_ref, b4_ref):
    h = jnp.maximum(
        jnp.dot(x, w1_ref[...], preferred_element_type=jnp.float32)
        + b1_ref[...], 0.0)
    h = jnp.maximum(
        jnp.dot(h, w2_ref[...], preferred_element_type=jnp.float32)
        + b2_ref[...], 0.0)
    h = jnp.maximum(
        jnp.dot(h, w3_ref[...], preferred_element_type=jnp.float32)
        + b3_ref[...], 0.0)
    return (jnp.dot(h, w4_ref[...], preferred_element_type=jnp.float32)
            + b4_ref[...])


def sc_kernel(c5_ref, w1_ref, b1_ref, w2_ref, b2_ref, w3_ref, b3_ref,
              w4_ref, b4_ref, out_ref, acc_ref, *,
              hw_total, hw_tile, inv_hw, mask_tail):
    k = pl.program_id(1)

    @pl.when(k == 0)
    def _():
        acc_ref[...] = jnp.zeros_like(acc_ref)

    # Lane index, hoisted out of the chunk loop (only needed for tail masking;
    # when masking is needed all chunks are exactly 128 lanes wide).
    if mask_tail:
        lane_idx = jax.lax.broadcasted_iota(jnp.int32, acc_ref.shape, 2)
        block_start = k * hw_tile

    # Layout-preserving accumulation: collapse each 128-lane chunk of the block
    # into the lane-major accumulator with pure VALU adds.  The cross-lane
    # reduce / relayout is deferred to the final grid step.
    n_chunks = (hw_tile + 127) // 128
    for g in range(n_chunks):
        w = min(128, hw_tile - g * 128)
        chunk = c5_ref[:, :, g * 128:g * 128 + w].astype(jnp.float32)
        if mask_tail:
            rem = hw_total - (block_start + g * 128)   # valid lanes in this chunk
            chunk = jnp.where(lane_idx < rem, chunk, 0.0)
        acc_ref[:, :, 0:w] += chunk

    @pl.when(k == pl.num_programs(1) - 1)
    def _():
        pooled = jnp.sum(acc_ref[...], axis=-1) * inv_hw        # (b_tile, 512)
        out = _mlp_head(pooled, w1_ref, b1_ref, w2_ref, b2_ref,
                        w3_ref, b3_ref, w4_ref, b4_ref)
        out_ref[...] = out.astype(out_ref.dtype)


def sc_module_forward(c5_nchw, params, _tiles=None):
    """c5_nchw: (B, 512, H, W) float32/bfloat16. params: dict of weights/biases."""
    B, C, H, W = c5_nchw.shape
    assert C == 512, "SCmodule expects 512 channels in c5"
    HW = H * W
    # Pure view (no data movement): channels on sublanes, spatial on lanes.
    c5 = c5_nchw.reshape(B, C, HW)

    vmem_cap = _vmem_capacity_bytes()
    # Scoped-VMEM budget: ~48 MiB on v7x (64 MiB physical), 64 MiB on v5e/v6e.
    vmem_target = max(min(vmem_cap - 16 * _MiB, 64 * _MiB), 16 * _MiB)
    if _tiles is None:
        b_tile, hw_tile = _choose_tiles(B, C, HW, c5.dtype.itemsize, vmem_target)
    else:
        b_tile, hw_tile = _tiles

    n_b = B // b_tile
    n_k = -(-HW // hw_tile)                       # cdiv: tail block masked in-kernel
    mask_tail = (n_k > 1) and (HW % hw_tile != 0)
    lane_w = min(hw_tile, 128)

    c5_spec = pl.BlockSpec((b_tile, C, hw_tile), lambda i, k: (i, 0, k))
    out_spec = pl.BlockSpec((b_tile, 1), lambda i, k: (i, 0))

    def resident(arr):
        nd = arr.ndim
        # Constant index_map: params DMA'd once, stay resident in VMEM.
        return pl.BlockSpec(arr.shape, lambda i, k, _nd=nd: (0,) * _nd)

    in_specs = [
        c5_spec,
        resident(params["w1"]), resident(params["b1"]),
        resident(params["w2"]), resident(params["b2"]),
        resident(params["w3"]), resident(params["b3"]),
        resident(params["w4"]), resident(params["b4"]),
    ]

    kernel = functools.partial(
        sc_kernel, hw_total=HW, hw_tile=hw_tile,
        inv_hw=float(1.0 / HW), mask_tail=mask_tail)

    # Leave headroom above our budget model while staying under physical VMEM.
    vmem_limit = int(min(vmem_cap - 8 * _MiB, vmem_target + 16 * _MiB))

    return pl.pallas_call(
        kernel,
        out_shape=jax.ShapeDtypeStruct((B, 1), jnp.float32),
        grid_spec=pltpu.PrefetchScalarGridSpec(
            num_scalar_prefetch=0,
            grid=(n_b, n_k),
            in_specs=in_specs,
            out_specs=out_spec,
            scratch_shapes=[pltpu.VMEM((b_tile, C, lane_w), jnp.float32)],
        ),
        compiler_params=pltpu.CompilerParams(
            dimension_semantics=("parallel", "arbitrary"),
            vmem_limit_bytes=vmem_limit),
    )(c5,
      params["w1"], params["b1"],
      params["w2"], params["b2"],
      params["w3"], params["b3"],
      params["w4"], params["b4"])


def init_params(key):
    """Deterministic init mimicking nn.Linear (uniform in +-1/sqrt(fan_in))."""
    dims = [(512, 256), (256, 128), (128, 64), (64, 1)]
    params = {}
    keys = jax.random.split(key, 2 * len(dims))
    for i, (fin, fout) in enumerate(dims):
        bound = 1.0 / jnp.sqrt(fin)
        params[f"w{i+1}"] = jax.random.uniform(
            keys[2 * i], (fin, fout), jnp.float32, -bound, bound)
        params[f"b{i+1}"] = jax.random.uniform(
            keys[2 * i + 1], (1, fout), jnp.float32, -bound, bound)
    return params


def reference_forward(c5_nchw, params):
    """Plain-JAX reference for sanity checking."""
    x = jnp.mean(c5_nchw.astype(jnp.float32), axis=(2, 3))  # (B, 512)
    h = jnp.maximum(x @ params["w1"] + params["b1"], 0.0)
    h = jnp.maximum(h @ params["w2"] + params["b2"], 0.0)
    h = jnp.maximum(h @ params["w3"] + params["b3"], 0.0)
    return h @ params["w4"] + params["b4"]


if __name__ == "__main__":
    key = jax.random.PRNGKey(0)
    k_param, k_c5, k_c5b = jax.random.split(key, 3)

    params = init_params(k_param)

    # Small shapes consistent with the module: c5 must have 512 channels.
    B, C, H, W = 2, 512, 4, 4
    c5 = jax.random.normal(k_c5, (B, C, H, W), jnp.float32)

    out = sc_module_forward(c5, params)
    out = jax.block_until_ready(out)
    ref = reference_forward(c5, params)
    assert out.shape == (B, 1)
    assert jnp.allclose(out, ref, atol=1e-4, rtol=1e-4)

    # Exercise the multi-step HW-reduction path with a masked tail block
    # (HW = 36 not a multiple of the forced hw_tile = 16) at small shapes.
    c5b = jax.random.normal(k_c5b, (2, 512, 6, 6), jnp.float32)
    out_b = jax.block_until_ready(
        sc_module_forward(c5b, params, _tiles=(2, 16)))
    ref_b = reference_forward(c5b, params)
    assert jnp.allclose(out_b, ref_b, atol=1e-4, rtol=1e-4)

    print("KERNEL_OK")
</pallas_src>

<mosaic_0001>
module attributes {stable_mosaic.version = 11 : i64} {
  func.func @sc_kernel(%arg0: i32, %arg1: i32, %arg2: memref<2x512x16xf32, #tpu.memory_space<vmem>>, %arg3: memref<512x256xf32, #tpu.memory_space<vmem>>, %arg4: memref<1x256xf32, #tpu.memory_space<vmem>>, %arg5: memref<256x128xf32, #tpu.memory_space<vmem>>, %arg6: memref<1x128xf32, #tpu.memory_space<vmem>>, %arg7: memref<128x64xf32, #tpu.memory_space<vmem>>, %arg8: memref<1x64xf32, #tpu.memory_space<vmem>>, %arg9: memref<64x1xf32, #tpu.memory_space<vmem>>, %arg10: memref<1x1xf32, #tpu.memory_space<vmem>>, %arg11: memref<2x1xf32, #tpu.memory_space<vmem>>, %arg12: memref<2x512x16xf32, #tpu.memory_space<vmem>>) attributes {dimension_semantics = [#tpu.dimension_semantics<parallel>, #tpu.dimension_semantics<arbitrary>], iteration_bounds = array<i64: 1, 1>, scalar_prefetch = 0 : i64, scratch_operands = 1 : i64, tpu.core_type = #tpu.core_type<tc>, window_params = [{transform_indices = @transform_0, window_bounds = array<i64: 2, 512, 16>}, {pipeline_mode = #tpu.pipeline_mode<synchronous>, transform_indices = @transform_1, window_bounds = array<i64: 512, 256>}, {pipeline_mode = #tpu.pipeline_mode<synchronous>, transform_indices = @transform_2, window_bounds = array<i64: 1, 256>}, {pipeline_mode = #tpu.pipeline_mode<synchronous>, transform_indices = @transform_3, window_bounds = array<i64: 256, 128>}, {pipeline_mode = #tpu.pipeline_mode<synchronous>, transform_indices = @transform_4, window_bounds = array<i64: 1, 128>}, {pipeline_mode = #tpu.pipeline_mode<synchronous>, transform_indices = @transform_5, window_bounds = array<i64: 128, 64>}, {pipeline_mode = #tpu.pipeline_mode<synchronous>, transform_indices = @transform_6, window_bounds = array<i64: 1, 64>}, {pipeline_mode = #tpu.pipeline_mode<synchronous>, transform_indices = @transform_7, window_bounds = array<i64: 64, 1>}, {pipeline_mode = #tpu.pipeline_mode<synchronous>, transform_indices = @transform_8, window_bounds = array<i64: 1, 1>}, {transform_indices = @transform_9, window_bounds = array<i64: 2, 1>}]} {
    %c0_i32 = arith.constant 0 : i32
    %0 = arith.cmpi eq, %arg1, %c0_i32 : i32
    %1 = arith.extui %0 : i1 to i32
    %c0_i32_0 = arith.constant 0 : i32
    %2 = arith.cmpi ne, %1, %c0_i32_0 : i32
    scf.if %2 {
      %cst = arith.constant 0.000000e+00 : f32
      %10 = vector.broadcast %cst : f32 to vector<2x512x16xf32>
      %c0_11 = arith.constant 0 : index
      %c0_12 = arith.constant 0 : index
      %c0_13 = arith.constant 0 : index
      %11 = vector.load %arg12[%c0_11, %c0_12, %c0_13] : memref<2x512x16xf32, #tpu.memory_space<vmem>>, vector<2x512x16xf32>
      tpu.vector_store %arg12[%c0_11, %c0_12, %c0_13], %10 {strides = array<i32>} : memref<2x512x16xf32, #tpu.memory_space<vmem>>, vector<2x512x16xf32>,
    } else {
    }
    %c0 = arith.constant 0 : index
    %c0_1 = arith.constant 0 : index
    %c0_2 = arith.constant 0 : index
    %3 = vector.load %arg2[%c0, %c0_1, %c0_2] : memref<2x512x16xf32, #tpu.memory_space<vmem>>, vector<2x512x16xf32>
    %c0_3 = arith.constant 0 : index
    %c0_4 = arith.constant 0 : index
    %c0_5 = arith.constant 0 : index
    %4 = vector.load %arg12[%c0_3, %c0_4, %c0_5] : memref<2x512x16xf32, #tpu.memory_space<vmem>>, vector<2x512x16xf32>
    %5 = arith.addf %4, %3 : vector<2x512x16xf32>
    %c0_6 = arith.constant 0 : index
    %c0_7 = arith.constant 0 : index
    %c0_8 = arith.constant 0 : index
    %6 = vector.load %arg12[%c0_6, %c0_7, %c0_8] : memref<2x512x16xf32, #tpu.memory_space<vmem>>, vector<2x512x16xf32>
    tpu.vector_store %arg12[%c0_6, %c0_7, %c0_8], %5 {strides = array<i32>} : memref<2x512x16xf32, #tpu.memory_space<vmem>>, vector<2x512x16xf32>,
    %c0_i32_9 = arith.constant 0 : i32
    %7 = arith.cmpi eq, %arg1, %c0_i32_9 : i32
    %8 = arith.extui %7 : i1 to i32
    %c0_i32_10 = arith.constant 0 : i32
    %9 = arith.cmpi ne, %8, %c0_i32_10 : i32
    scf.if %9 {
      %c0_11 = arith.constant 0 : index
      %c0_12 = arith.constant 0 : index
      %c0_13 = arith.constant 0 : index
      %10 = vector.load %arg12[%c0_11, %c0_12, %c0_13] : memref<2x512x16xf32, #tpu.memory_space<vmem>>, vector<2x512x16xf32>
      %cst = arith.constant dense<0.000000e+00> : vector<2x512xf32>
      %11 = vector.multi_reduction <add>, %10, %cst [2] : vector<2x512x16xf32> to vector<2x512xf32>
      %cst_14 = arith.constant 6.250000e-02 : f32
      %12 = vector.broadcast %cst_14 : f32 to vector<2x512xf32>
      %13 = arith.mulf %11, %12 : vector<2x512xf32>
      %c0_15 = arith.constant 0 : index
      %c0_16 = arith.constant 0 : index
      %14 = vector.load %arg3[%c0_15, %c0_16] : memref<512x256xf32, #tpu.memory_space<vmem>>, vector<512x256xf32>
      %cst_17 = arith.constant dense<0.000000e+00> : vector<2x256xf32>
      %15 = tpu.matmul %13, %14, %cst_17 {dimension_numbers = #tpu.dot_dimension_numbers<[1], [0], [0], [1], [0, 0, 1, 1], [], []>} : vector<2x512xf32>, vector<512x256xf32>, vector<2x256xf32> -> vector<2x256xf32>
      %c0_18 = arith.constant 0 : index
      %c0_19 = arith.constant 0 : index
      %16 = vector.load %arg4[%c0_18, %c0_19] : memref<1x256xf32, #tpu.memory_space<vmem>>, vector<1x256xf32>
      %17 = vector.broadcast %16 : vector<1x256xf32> to vector<2x256xf32>
      %18 = arith.addf %15, %17 : vector<2x256xf32>
      %cst_20 = arith.constant 0.000000e+00 : f32
      %19 = vector.broadcast %cst_20 : f32 to vector<2x256xf32>
      %20 = arith.maximumf %18, %19 : vector<2x256xf32>
      %c0_21 = arith.constant 0 : index
      %c0_22 = arith.constant 0 : index
      %21 = vector.load %arg5[%c0_21, %c0_22] : memref<256x128xf32, #tpu.memory_space<vmem>>, vector<256x128xf32>
      %cst_23 = arith.constant dense<0.000000e+00> : vector<2x128xf32>
      %22 = tpu.matmul %20, %21, %cst_23 {dimension_numbers = #tpu.dot_dimension_numbers<[1], [0], [0], [1], [0, 0, 1, 1], [], []>} : vector<2x256xf32>, vector<256x128xf32>, vector<2x128xf32> -> vector<2x128xf32>
      %c0_24 = arith.constant 0 : index
      %c0_25 = arith.constant 0 : index
      %23 = vector.load %arg6[%c0_24, %c0_25] : memref<1x128xf32, #tpu.memory_space<vmem>>, vector<1x128xf32>
      %24 = vector.broadcast %23 : vector<1x128xf32> to vector<2x128xf32>
      %25 = arith.addf %22, %24 : vector<2x128xf32>
      %cst_26 = arith.constant 0.000000e+00 : f32
      %26 = vector.broadcast %cst_26 : f32 to vector<2x128xf32>
      %27 = arith.maximumf %25, %26 : vector<2x128xf32>
      %c0_27 = arith.constant 0 : index
      %c0_28 = arith.constant 0 : index
      %28 = vector.load %arg7[%c0_27, %c0_28] : memref<128x64xf32, #tpu.memory_space<vmem>>, vector<128x64xf32>
      %cst_29 = arith.constant dense<0.000000e+00> : vector<2x64xf32>
      %29 = tpu.matmul %27, %28, %cst_29 {dimension_numbers = #tpu.dot_dimension_numbers<[1], [0], [0], [1], [0, 0, 1, 1], [], []>} : vector<2x128xf32>, vector<128x64xf32>, vector<2x64xf32> -> vector<2x64xf32>
      %c0_30 = arith.constant 0 : index
      %c0_31 = arith.constant 0 : index
      %30 = vector.load %arg8[%c0_30, %c0_31] : memref<1x64xf32, #tpu.memory_space<vmem>>, vector<1x64xf32>
      %31 = vector.broadcast %30 : vector<1x64xf32> to vector<2x64xf32>
      %32 = arith.addf %29, %31 : vector<2x64xf32>
      %cst_32 = arith.constant 0.000000e+00 : f32
      %33 = vector.broadcast %cst_32 : f32 to vector<2x64xf32>
      %34 = arith.maximumf %32, %33 : vector<2x64xf32>
      %c0_33 = arith.constant 0 : index
      %c0_34 = arith.constant 0 : index
      %35 = vector.load %arg9[%c0_33, %c0_34] : memref<64x1xf32, #tpu.memory_space<vmem>>, vector<64x1xf32>
      %cst_35 = arith.constant dense<0.000000e+00> : vector<2x1xf32>
      %36 = tpu.matmul %34, %35, %cst_35 {dimension_numbers = #tpu.dot_dimension_numbers<[1], [0], [0], [1], [0, 0, 1, 1], [], []>} : vector<2x64xf32>, vector<64x1xf32>, vector<2x1xf32> -> vector<2x1xf32>
      %c0_36 = arith.constant 0 : index
      %c0_37 = arith.constant 0 : index
      %37 = vector.load %arg10[%c0_36, %c0_37] : memref<1x1xf32, #tpu.memory_space<vmem>>, vector<1x1xf32>
      %38 = vector.broadcast %37 : vector<1x1xf32> to vector<2x1xf32>
      %39 = arith.addf %36, %38 : vector<2x1xf32>
      %c0_38 = arith.constant 0 : index
      %c0_39 = arith.constant 0 : index
      %40 = vector.load %arg11[%c0_38, %c0_39] : memref<2x1xf32, #tpu.memory_space<vmem>>, vector<2x1xf32>
      tpu.vector_store %arg11[%c0_38, %c0_39], %39 {strides = array<i32>} : memref<2x1xf32, #tpu.memory_space<vmem>>, vector<2x1xf32>,
    } else {
    }
    return
  }
  func.func @transform_0(%arg0: i32, %arg1: i32) -> (i32, i32, i32) {
    %c0_i32 = arith.constant 0 : i32
    %c0_i32_0 = arith.constant 0 : i32
    return %arg0, %c0_i32, %arg1 : i32, i32, i32
  }
  func.func @transform_1(%arg0: i32, %arg1: i32) -> (i32, i32) {
    %c0_i32 = arith.constant 0 : i32
    %c0_i32_0 = arith.constant 0 : i32
    %c0_i32_1 = arith.constant 0 : i32
    return %c0_i32, %c0_i32_0 : i32, i32
  }
  func.func @transform_2(%arg0: i32, %arg1: i32) -> (i32, i32) {
    %c0_i32 = arith.constant 0 : i32
    %c0_i32_0 = arith.constant 0 : i32
    %c0_i32_1 = arith.constant 0 : i32
    return %c0_i32, %c0_i32_0 : i32, i32
  }
  func.func @transform_3(%arg0: i32, %arg1: i32) -> (i32, i32) {
    %c0_i32 = arith.constant 0 : i32
    %c0_i32_0 = arith.constant 0 : i32
    %c0_i32_1 = arith.constant 0 : i32
    return %c0_i32, %c0_i32_0 : i32, i32
  }
  func.func @transform_4(%arg0: i32, %arg1: i32) -> (i32, i32) {
    %c0_i32 = arith.constant 0 : i32
    %c0_i32_0 = arith.constant 0 : i32
    %c0_i32_1 = arith.constant 0 : i32
    return %c0_i32, %c0_i32_0 : i32, i32
  }
  func.func @transform_5(%arg0: i32, %arg1: i32) -> (i32, i32) {
    %c0_i32 = arith.constant 0 : i32
    %c0_i32_0 = arith.constant 0 : i32
    %c0_i32_1 = arith.constant 0 : i32
    return %c0_i32, %c0_i32_0 : i32, i32
  }
  func.func @transform_6(%arg0: i32, %arg1: i32) -> (i32, i32) {
    %c0_i32 = arith.constant 0 : i32
    %c0_i32_0 = arith.constant 0 : i32
    %c0_i32_1 = arith.constant 0 : i32
    return %c0_i32, %c0_i32_0 : i32, i32
  }
  func.func @transform_7(%arg0: i32, %arg1: i32) -> (i32, i32) {
    %c0_i32 = arith.constant 0 : i32
    %c0_i32_0 = arith.constant 0 : i32
    %c0_i32_1 = arith.constant 0 : i32
    return %c0_i32, %c0_i32_0 : i32, i32
  }
  func.func @transform_8(%arg0: i32, %arg1: i32) -> (i32, i32) {
    %c0_i32 = arith.constant 0 : i32
    %c0_i32_0 = arith.constant 0 : i32
    %c0_i32_1 = arith.constant 0 : i32
    return %c0_i32, %c0_i32_0 : i32, i32
  }
  func.func @transform_9(%arg0: i32, %arg1: i32) -> (i32, i32) {
    %c0_i32 = arith.constant 0 : i32
    %c0_i32_0 = arith.constant 0 : i32
    return %arg0, %c0_i32 : i32, i32
  }
}

</mosaic_0001>

<llo_original>
// kernel: tpu_custom_call.1
$region0: #{tpu_custom_call.1}
  #allocation0 [shape = 'u32[]', space=smem, size = 0x4, offset = 0x4, fixed_abs, tag = 'smem constant byte address 0x4 - core index']
  #allocation1 [shape = 'u32[144,128]{1,0:T(1,128)}', space=vmem, size = 0x12000, scoped, tag = 'internal scratch']
  #allocation2 [shape = 'f32[2,512,16]{2,1,0:T(8,128)}', space=vmem, size = 0x80000, scoped, tag = 'scratch operand']
  #allocation3 [shape = 'f32[1,1]{1,0:T(1,128)S(1)}', space=vmem, size = 0x200, scoped, tag = 'scoped memory for tpu_custom_call.1']
  %s0 = inlined_call_operand.vmem [shape: f32[2,512,16], index: 0, kind: input, shape index: {}]
  %s1 = inlined_call_operand.vmem [shape: f32[512,256], index: 1, kind: input, shape index: {}]
  %s2 = inlined_call_operand.vmem [shape: f32[1,256], index: 2, kind: input, shape index: {}]
  %s3 = inlined_call_operand.vmem [shape: f32[256,128], index: 3, kind: input, shape index: {}]
  %s4 = inlined_call_operand.vmem [shape: f32[1,128], index: 4, kind: input, shape index: {}]
  %s5 = inlined_call_operand.vmem [shape: f32[128,64], index: 5, kind: input, shape index: {}]
  %s6 = inlined_call_operand.vmem [shape: f32[1,64], index: 6, kind: input, shape index: {}]
  %s7 = inlined_call_operand.vmem [shape: f32[64,1], index: 7, kind: input, shape index: {}]
  %s8 = inlined_call_operand.<no memory space> [shape: f32[1,1], index: 8, kind: input, shape index: {}]
  %s9 = inlined_call_operand.vmem [shape: f32[2,1], index: 9, kind: output, shape index: {}]
  %s10 = sld [smem:[#allocation0]]
  $region54: #{tpu_custom_call.1} parent=0
    _
  %s12 = ssub.s32 1, %s10
  %s13 = scalar_select 0, %s12, %s10
  %v14 = vstv %s8
  %15 = vst [vmem:[#allocation3] sm:$0x1] %v14
  // Predicated region
  $region2: #{tpu_custom_call.1} parent=0 // pred_check
    _
  $region3: #{tpu_custom_call.1} parent=0 // pred_check_branch
    %17 = sbr.rel (0) target = $region5
  $region4: #{tpu_custom_call.1} parent=0 // pred_region
    _
  $region5: #{tpu_custom_call.1} parent=0 // pred_fallthru
    _
  // Predicated region
  $region6: #{tpu_custom_call.1} parent=0 // pred_check
    _
  $region7: #{tpu_custom_call.1} parent=0 // pred_check_branch
    %19 = sbr.rel (0) target = $region9
  $region8: #{tpu_custom_call.1} parent=0 // pred_region
    _
  $region9: #{tpu_custom_call.1} parent=0 // pred_fallthru
    _
  // Predicated region
  $region10: #{tpu_custom_call.1} parent=0 // pred_check
    _
  $region11: #{tpu_custom_call.1} parent=0 // pred_check_branch
    %21 = sbr.rel (0) target = $region13
  $region12: #{tpu_custom_call.1} parent=0 // pred_region
    _
  $region13: #{tpu_custom_call.1} parent=0 // pred_fallthru
    _
  // Predicated region
  $region14: #{tpu_custom_call.1} parent=0 // pred_check
    _
  $region15: #{tpu_custom_call.1} parent=0 // pred_check_branch
    %23 = sbr.rel (0) target = $region17
  $region16: #{tpu_custom_call.1} parent=0 // pred_region
    _
  $region17: #{tpu_custom_call.1} parent=0 // pred_fallthru
    _
  // Predicated region
  $region18: #{tpu_custom_call.1} parent=0 // pred_check
    _
  $region19: #{tpu_custom_call.1} parent=0 // pred_check_branch
    %25 = sbr.rel (0) target = $region21
  $region20: #{tpu_custom_call.1} parent=0 // pred_region
    _
  $region21: #{tpu_custom_call.1} parent=0 // pred_fallthru
    _
  // Predicated region
  $region22: #{tpu_custom_call.1} parent=0 // pred_check
    _
  $region23: #{tpu_custom_call.1} parent=0 // pred_check_branch
    %27 = sbr.rel (0) target = $region25
  $region24: #{tpu_custom_call.1} parent=0 // pred_region
    _
  $region25: #{tpu_custom_call.1} parent=0 // pred_fallthru
    _
  // Predicated region
  $region26: #{tpu_custom_call.1} parent=0 // pred_check
    _
  $region27: #{tpu_custom_call.1} parent=0 // pred_check_branch
    %29 = sbr.rel (0) target = $region29
  $region28: #{tpu_custom_call.1} parent=0 // pred_region
    _
  $region29: #{tpu_custom_call.1} parent=0 // pred_fallthru
    _
  // Predicated region
  $region30: #{tpu_custom_call.1} parent=0 // pred_check
    _
  $region31: #{tpu_custom_call.1} parent=0 // pred_check_branch
    %31 = sbr.rel (0) target = $region33
  $region32: #{tpu_custom_call.1} parent=0 // pred_region
    _
  $region33: #{tpu_custom_call.1} parent=0 // pred_fallthru
    _
  // Predicated region
  $region34: #{tpu_custom_call.1} parent=0 // pred_check
    _
  $region35: #{tpu_custom_call.1} parent=0 // pred_check_branch
    %33 = sbr.rel (0) target = $region37
  $region36: #{tpu_custom_call.1} parent=0 // pred_region
    _
  $region37: #{tpu_custom_call.1} parent=0 // pred_fallthru
    _
  %p34 = scmp.eq.s32.totalorder 0, 0
  // Predicated region
  $region38: #{tpu_custom_call.1} parent=0 // pred_check
    %p35 = pneg %p34
  $region39: #{tpu_custom_call.1} parent=0 // pred_check_branch
    %37 = sbr.rel (%p35) target = $region41
  $region40: #{tpu_custom_call.1} parent=0 // pred_region
    %vm38 = vcmask 130048
    %39 = vst.msk [vmem:[#allocation2] sm:$0xff] %vm38, 0.0
    %40 = vst.msk [vmem:[#allocation2 + $0x8] sm:$0xff] %vm38, 0.0
    %41 = vst.msk [vmem:[#allocation2 + $0x10] sm:$0xff] %vm38, 0.0
    %42 = vst.msk [vmem:[#allocation2 + $0x18] sm:$0xff] %vm38, 0.0
    %43 = vst.msk [vmem:[#allocation2 + $0x20] sm:$0xff] %vm38, 0.0
    %44 = vst.msk [vmem:[#allocation2 + $0x28] sm:$0xff] %vm38, 0.0
    %45 = vst.msk [vmem:[#allocation2 + $0x30] sm:$0xff] %vm38, 0.0
    %46 = vst.msk [vmem:[#allocation2 + $0x38] sm:$0xff] %vm38, 0.0
    %47 = vst.msk [vmem:[#allocation2 + $0x40] sm:$0xff] %vm38, 0.0
    %48 = vst.msk [vmem:[#allocation2 + $0x48] sm:$0xff] %vm38, 0.0
    %49 = vst.msk [vmem:[#allocation2 + $0x50] sm:$0xff] %vm38, 0.0
    %50 = vst.msk [vmem:[#allocation2 + $0x58] sm:$0xff] %vm38, 0.0
    %51 = vst.msk [vmem:[#allocation2 + $0x60] sm:$0xff] %vm38, 0.0
    %52 = vst.msk [vmem:[#allocation2 + $0x68] sm:$0xff] %vm38, 0.0
    %53 = vst.msk [vmem:[#allocation2 + $0x70] sm:$0xff] %vm38, 0.0
    %54 = vst.msk [vmem:[#allocation2 + $0x78] sm:$0xff] %vm38, 0.0
    %55 = vst.msk [vmem:[#allocation2 + $0x80] sm:$0xff] %vm38, 0.0
    %56 = vst.msk [vmem:[#allocation2 + $0x88] sm:$0xff] %vm38, 0.0
    %57 = vst.msk [vmem:[#allocation2 + $0x90] sm:$0xff] %vm38, 0.0
    %58 = vst.msk [vmem:[#allocation2 + $0x98] sm:$0xff] %vm38, 0.0
    %59 = vst.msk [vmem:[#allocation2 + $0xa0] sm:$0xff] %vm38, 0.0
    %60 = vst.msk [vmem:[#allocation2 + $0xa8] sm:$0xff] %vm38, 0.0
    %61 = vst.msk [vmem:[#allocation2 + $0xb0] sm:$0xff] %vm38, 0.0
    %62 = vst.msk [vmem:[#allocation2 + $0xb8] sm:$0xff] %vm38, 0.0
    %63 = vst.msk [vmem:[#allocation2 + $0xc0] sm:$0xff] %vm38, 0.0
    %64 = vst.msk [vmem:[#allocation2 + $0xc8] sm:$0xff] %vm38, 0.0
    %65 = vst.msk [vmem:[#allocation2 + $0xd0] sm:$0xff] %vm38, 0.0
    %66 = vst.msk [vmem:[#allocation2 + $0xd8] sm:$0xff] %vm38, 0.0
    %67 = vst.msk [vmem:[#allocation2 + $0xe0] sm:$0xff] %vm38, 0.0
    %68 = vst.msk [vmem:[#allocation2 + $0xe8] sm:$0xff] %vm38, 0.0
    %69 = vst.msk [vmem:[#allocation2 + $0xf0] sm:$0xff] %vm38, 0.0
    %70 = vst.msk [vmem:[#allocation2 + $0xf8] sm:$0xff] %vm38, 0.0
    %71 = vst.msk [vmem:[#allocation2 + $0x100] sm:$0xff] %vm38, 0.0
    %72 = vst.msk [vmem:[#allocation2 + $0x108] sm:$0xff] %vm38, 0.0
    %73 = vst.msk [vmem:[#allocation2 + $0x110] sm:$0xff] %vm38, 0.0
    %74 = vst.msk [vmem:[#allocation2 + $0x118] sm:$0xff] %vm38, 0.0
    %75 = vst.msk [vmem:[#allocation2 + $0x120] sm:$0xff] %vm38, 0.0
    %76 = vst.msk [vmem:[#allocation2 + $0x128] sm:$0xff] %vm38, 0.0
    %77 = vst.msk [vmem:[#allocation2 + $0x130] sm:$0xff] %vm38, 0.0
    %78 = vst.msk [vmem:[#allocation2 + $0x138] sm:$0xff] %vm38, 0.0
    %79 = vst.msk [vmem:[#allocation2 + $0x140] sm:$0xff] %vm38, 0.0
    %80 = vst.msk [vmem:[#allocation2 + $0x148] sm:$0xff] %vm38, 0.0
    %81 = vst.msk [vmem:[#allocation2 + $0x150] sm:$0xff] %vm38, 0.0
    %82 = vst.msk [vmem:[#allocation2 + $0x158] sm:$0xff] %vm38, 0.0
    %83 = vst.msk [vmem:[#allocation2 + $0x160] sm:$0xff] %vm38, 0.0
    %84 = vst.msk [vmem:[#allocation2 + $0x168] sm:$0xff] %vm38, 0.0
    %85 = vst.msk [vmem:[#allocation2 + $0x170] sm:$0xff] %vm38, 0.0
    %86 = vst.msk [vmem:[#allocation2 + $0x178] sm:$0xff] %vm38, 0.0
    %87 = vst.msk [vmem:[#allocation2 + $0x180] sm:$0xff] %vm38, 0.0
    %88 = vst.msk [vmem:[#allocation2 + $0x188] sm:$0xff] %vm38, 0.0
    %89 = vst.msk [vmem:[#allocation2 + $0x190] sm:$0xff] %vm38, 0.0
    %90 = vst.msk [vmem:[#allocation2 + $0x198] sm:$0xff] %vm38, 0.0
    %91 = vst.msk [vmem:[#allocation2 + $0x1a0] sm:$0xff] %vm38, 0.0
    %92 = vst.msk [vmem:[#allocation2 + $0x1a8] sm:$0xff] %vm38, 0.0
    %93 = vst.msk [vmem:[#allocation2 + $0x1b0] sm:$0xff] %vm38, 0.0
    %94 = vst.msk [vmem:[#allocation2 + $0x1b8] sm:$0xff] %vm38, 0.0
    %95 = vst.msk [vmem:[#allocation2 + $0x1c0] sm:$0xff] %vm38, 0.0
    %96 = vst.msk [vmem:[#allocation2 + $0x1c8] sm:$0xff] %vm38, 0.0
    %97 = vst.msk [vmem:[#allocation2 + $0x1d0] sm:$0xff] %vm38, 0.0
    %98 = vst.msk [vmem:[#allocation2 + $0x1d8] sm:$0xff] %vm38, 0.0
    %99 = vst.msk [vmem:[#allocation2 + $0x1e0] sm:$0xff] %vm38, 0.0
    %100 = vst.msk [vmem:[#allocation2 + $0x1e8] sm:$0xff] %vm38, 0.0
    %101 = vst.msk [vmem:[#allocation2 + $0x1f0] sm:$0xff] %vm38, 0.0
    %102 = vst.msk [vmem:[#allocation2 + $0x1f8] sm:$0xff] %vm38, 0.0
    %103 = vst.msk [vmem:[#allocation2 + $0x200] sm:$0xff] %vm38, 0.0
    %104 = vst.msk [vmem:[#allocation2 + $0x208] sm:$0xff] %vm38, 0.0
    %105 = vst.msk [vmem:[#allocation2 + $0x210] sm:$0xff] %vm38, 0.0
    %106 = vst.msk [vmem:[#allocation2 + $0x218] sm:$0xff] %vm38, 0.0
    %107 = vst.msk [vmem:[#allocation2 + $0x220] sm:$0xff] %vm38, 0.0
    %108 = vst.msk [vmem:[#allocation2 + $0x228] sm:$0xff] %vm38, 0.0
    %109 = vst.msk [vmem:[#allocation2 + $0x230] sm:$0xff] %vm38, 0.0
    %110 = vst.msk [vmem:[#allocation2 + $0x238] sm:$0xff] %vm38, 0.0
    %111 = vst.msk [vmem:[#allocation2 + $0x240] sm:$0xff] %vm38, 0.0
    %112 = vst.msk [vmem:[#allocation2 + $0x248] sm:$0xff] %vm38, 0.0
    %113 = vst.msk [vmem:[#allocation2 + $0x250] sm:$0xff] %vm38, 0.0
    %114 = vst.msk [vmem:[#allocation2 + $0x258] sm:$0xff] %vm38, 0.0
    %115 = vst.msk [vmem:[#allocation2 + $0x260] sm:$0xff] %vm38, 0.0
    %116 = vst.msk [vmem:[#allocation2 + $0x268] sm:$0xff] %vm38, 0.0
    %117 = vst.msk [vmem:[#allocation2 + $0x270] sm:$0xff] %vm38, 0.0
    %118 = vst.msk [vmem:[#allocation2 + $0x278] sm:$0xff] %vm38, 0.0
    %119 = vst.msk [vmem:[#allocation2 + $0x280] sm:$0xff] %vm38, 0.0
    %120 = vst.msk [vmem:[#allocation2 + $0x288] sm:$0xff] %vm38, 0.0
    %121 = vst.msk [vmem:[#allocation2 + $0x290] sm:$0xff] %vm38, 0.0
    %122 = vst.msk [vmem:[#allocation2 + $0x298] sm:$0xff] %vm38, 0.0
    %123 = vst.msk [vmem:[#allocation2 + $0x2a0] sm:$0xff] %vm38, 0.0
    %124 = vst.msk [vmem:[#allocation2 + $0x2a8] sm:$0xff] %vm38, 0.0
    %125 = vst.msk [vmem:[#allocation2 + $0x2b0] sm:$0xff] %vm38, 0.0
    %126 = vst.msk [vmem:[#allocation2 + $0x2b8] sm:$0xff] %vm38, 0.0
    %127 = vst.msk [vmem:[#allocation2 + $0x2c0] sm:$0xff] %vm38, 0.0
    %128 = vst.msk [vmem:[#allocation2 + $0x2c8] sm:$0xff] %vm38, 0.0
    %129 = vst.msk [vmem:[#allocation2 + $0x2d0] sm:$0xff] %vm38, 0.0
    %130 = vst.msk [vmem:[#allocation2 + $0x2d8] sm:$0xff] %vm38, 0.0
    %131 = vst.msk [vmem:[#allocation2 + $0x2e0] sm:$0xff] %vm38, 0.0
    %132 = vst.msk [vmem:[#allocation2 + $0x2e8] sm:$0xff] %vm38, 0.0
    %133 = vst.msk [vmem:[#allocation2 + $0x2f0] sm:$0xff] %vm38, 0.0
    %134 = vst.msk [vmem:[#allocation2 + $0x2f8] sm:$0xff] %vm38, 0.0
    %135 = vst.msk [vmem:[#allocation2 + $0x300] sm:$0xff] %vm38, 0.0
    %136 = vst.msk [vmem:[#allocation2 + $0x308] sm:$0xff] %vm38, 0.0
    %137 = vst.msk [vmem:[#allocation2 + $0x310] sm:$0xff] %vm38, 0.0
    %138 = vst.msk [vmem:[#allocation2 + $0x318] sm:$0xff] %vm38, 0.0
    %139 = vst.msk [vmem:[#allocation2 + $0x320] sm:$0xff] %vm38, 0.0
    %140 = vst.msk [vmem:[#allocation2 + $0x328] sm:$0xff] %vm38, 0.0
    %141 = vst.msk [vmem:[#allocation2 + $0x330] sm:$0xff] %vm38, 0.0
    %142 = vst.msk [vmem:[#allocation2 + $0x338] sm:$0xff] %vm38, 0.0
    %143 = vst.msk [vmem:[#allocation2 + $0x340] sm:$0xff] %vm38, 0.0
    %144 = vst.msk [vmem:[#allocation2 + $0x348] sm:$0xff] %vm38, 0.0
    %145 = vst.msk [vmem:[#allocation2 + $0x350] sm:$0xff] %vm38, 0.0
    %146 = vst.msk [vmem:[#allocation2 + $0x358] sm:$0xff] %vm38, 0.0
    %147 = vst.msk [vmem:[#allocation2 + $0x360] sm:$0xff] %vm38, 0.0
    %148 = vst.msk [vmem:[#allocation2 + $0x368] sm:$0xff] %vm38, 0.0
    %149 = vst.msk [vmem:[#allocation2 + $0x370] sm:$0xff] %vm38, 0.0
    %150 = vst.msk [vmem:[#allocation2 + $0x378] sm:$0xff] %vm38, 0.0
    %151 = vst.msk [vmem:[#allocation2 + $0x380] sm:$0xff] %vm38, 0.0
    %152 = vst.msk [vmem:[#allocation2 + $0x388] sm:$0xff] %vm38, 0.0
    %153 = vst.msk [vmem:[#allocation2 + $0x390] sm:$0xff] %vm38, 0.0
    %154 = vst.msk [vmem:[#allocation2 + $0x398] sm:$0xff] %vm38, 0.0
    %155 = vst.msk [vmem:[#allocation2 + $0x3a0] sm:$0xff] %vm38, 0.0
    %156 = vst.msk [vmem:[#allocation2 + $0x3a8] sm:$0xff] %vm38, 0.0
    %157 = vst.msk [vmem:[#allocation2 + $0x3b0] sm:$0xff] %vm38, 0.0
    %158 = vst.msk [vmem:[#allocation2 + $0x3b8] sm:$0xff] %vm38, 0.0
    %159 = vst.msk [vmem:[#allocation2 + $0x3c0] sm:$0xff] %vm38, 0.0
    %160 = vst.msk [vmem:[#allocation2 + $0x3c8] sm:$0xff] %vm38, 0.0
    %161 = vst.msk [vmem:[#allocation2 + $0x3d0] sm:$0xff] %vm38, 0.0
    %162 = vst.msk [vmem:[#allocation2 + $0x3d8] sm:$0xff] %vm38, 0.0
    %163 = vst.msk [vmem:[#allocation2 + $0x3e0] sm:$0xff] %vm38, 0.0
    %164 = vst.msk [vmem:[#allocation2 + $0x3e8] sm:$0xff] %vm38, 0.0
    %165 = vst.msk [vmem:[#allocation2 + $0x3f0] sm:$0xff] %vm38, 0.0
    %166 = vst.msk [vmem:[#allocation2 + $0x3f8] sm:$0xff] %vm38, 0.0
  $region41: #{tpu_custom_call.1} parent=0 // pred_fallthru
    _
  %v167 = vld [vmem:[%s0] sm:$0xff]
  %v168 = vld [vmem:[%s0 + $0x8] sm:$0xff]
  %v169 = vld [vmem:[%s0 + $0x10] sm:$0xff]
  %v170 = vld [vmem:[%s0 + $0x18] sm:$0xff]
  %v171 = vld [vmem:[%s0 + $0x20] sm:$0xff]
  %v172 = vld [vmem:[%s0 + $0x28] sm:$0xff]
  %v173 = vld [vmem:[%s0 + $0x30] sm:$0xff]
  %v174 = vld [vmem:[%s0 + $0x38] sm:$0xff]
  %v175 = vld [vmem:[%s0 + $0x40] sm:$0xff]
  %v176 = vld [vmem:[%s0 + $0x48] sm:$0xff]
  %v177 = vld [vmem:[%s0 + $0x50] sm:$0xff]
  %v178 = vld [vmem:[%s0 + $0x58] sm:$0xff]
  %v179 = vld [vmem:[%s0 + $0x60] sm:$0xff]
  %v180 = vld [vmem:[%s0 + $0x68] sm:$0xff]
  %v181 = vld [vmem:[%s0 + $0x70] sm:$0xff]
  %v182 = vld [vmem:[%s0 + $0x78] sm:$0xff]
  %v183 = vld [vmem:[%s0 + $0x80] sm:$0xff]
  %v184 = vld [vmem:[%s0 + $0x88] sm:$0xff]
  %v185 = vld [vmem:[%s0 + $0x90] sm:$0xff]
  %v186 = vld [vmem:[%s0 + $0x98] sm:$0xff]
  %v187 = vld [vmem:[%s0 + $0xa0] sm:$0xff]
  %v188 = vld [vmem:[%s0 + $0xa8] sm:$0xff]
  %v189 = vld [vmem:[%s0 + $0xb0] sm:$0xff]
  %v190 = vld [vmem:[%s0 + $0xb8] sm:$0xff]
  %v191 = vld [vmem:[%s0 + $0xc0] sm:$0xff]
  %v192 = vld [vmem:[%s0 + $0xc8] sm:$0xff]
  %v193 = vld [vmem:[%s0 + $0xd0] sm:$0xff]
  %v194 = vld [vmem:[%s0 + $0xd8] sm:$0xff]
  %v195 = vld [vmem:[%s0 + $0xe0] sm:$0xff]
  %v196 = vld [vmem:[%s0 + $0xe8] sm:$0xff]
  %v197 = vld [vmem:[%s0 + $0xf0] sm:$0xff]
  %v198 = vld [vmem:[%s0 + $0xf8] sm:$0xff]
  %v199 = vld [vmem:[%s0 + $0x100] sm:$0xff]
  %v200 = vld [vmem:[%s0 + $0x108] sm:$0xff]
  %v201 = vld [vmem:[%s0 + $0x110] sm:$0xff]
  %v202 = vld [vmem:[%s0 + $0x118] sm:$0xff]
  %v203 = vld [vmem:[%s0 + $0x120] sm:$0xff]
  %v204 = vld [vmem:[%s0 + $0x128] sm:$0xff]
  %v205 = vld [vmem:[%s0 + $0x130] sm:$0xff]
  %v206 = vld [vmem:[%s0 + $0x138] sm:$0xff]
  %v207 = vld [vmem:[%s0 + $0x140] sm:$0xff]
  %v208 = vld [vmem:[%s0 + $0x148] sm:$0xff]
  %v209 = vld [vmem:[%s0 + $0x150] sm:$0xff]
  %v210 = vld [vmem:[%s0 + $0x158] sm:$0xff]
  %v211 = vld [vmem:[%s0 + $0x160] sm:$0xff]
  %v212 = vld [vmem:[%s0 + $0x168] sm:$0xff]
  %v213 = vld [vmem:[%s0 + $0x170] sm:$0xff]
  %v214 = vld [vmem:[%s0 + $0x178] sm:$0xff]
  %v215 = vld [vmem:[%s0 + $0x180] sm:$0xff]
  %v216 = vld [vmem:[%s0 + $0x188] sm:$0xff]
  %v217 = vld [vmem:[%s0 + $0x190] sm:$0xff]
  %v218 = vld [vmem:[%s0 + $0x198] sm:$0xff]
  %v219 = vld [vmem:[%s0 + $0x1a0] sm:$0xff]
  %v220 = vld [vmem:[%s0 + $0x1a8] sm:$0xff]
  %v221 = vld [vmem:[%s0 + $0x1b0] sm:$0xff]
  %v222 = vld [vmem:[%s0 + $0x1b8] sm:$0xff]
  %v223 = vld [vmem:[%s0 + $0x1c0] sm:$0xff]
  %v224 = vld [vmem:[%s0 + $0x1c8] sm:$0xff]
  %v225 = vld [vmem:[%s0 + $0x1d0] sm:$0xff]
  %v226 = vld [vmem:[%s0 + $0x1d8] sm:$0xff]
  %v227 = vld [vmem:[%s0 + $0x1e0] sm:$0xff]
  %v228 = vld [vmem:[%s0 + $0x1e8] sm:$0xff]
  %v229 = vld [vmem:[%s0 + $0x1f0] sm:$0xff]
  %v230 = vld [vmem:[%s0 + $0x1f8] sm:$0xff]
  %v231 = vld [vmem:[%s0 + $0x200] sm:$0xff]
  %v232 = vld [vmem:[%s0 + $0x208] sm:$0xff]
  %v233 = vld [vmem:[%s0 + $0x210] sm:$0xff]
  %v234 = vld [vmem:[%s0 + $0x218] sm:$0xff]
  %v235 = vld [vmem:[%s0 + $0x220] sm:$0xff]
  %v236 = vld [vmem:[%s0 + $0x228] sm:$0xff]
  %v237 = vld [vmem:[%s0 + $0x230] sm:$0xff]
  %v238 = vld [vmem:[%s0 + $0x238] sm:$0xff]
  %v239 = vld [vmem:[%s0 + $0x240] sm:$0xff]
  %v240 = vld [vmem:[%s0 + $0x248] sm:$0xff]
  %v241 = vld [vmem:[%s0 + $0x250] sm:$0xff]
  %v242 = vld [vmem:[%s0 + $0x258] sm:$0xff]
  %v243 = vld [vmem:[%s0 + $0x260] sm:$0xff]
  %v244 = vld [vmem:[%s0 + $0x268] sm:$0xff]
  %v245 = vld [vmem:[%s0 + $0x270] sm:$0xff]
  %v246 = vld [vmem:[%s0 + $0x278] sm:$0xff]
  %v247 = vld [vmem:[%s0 + $0x280] sm:$0xff]
  %v248 = vld [vmem:[%s0 + $0x288] sm:$0xff]
  %v249 = vld [vmem:[%s0 + $0x290] sm:$0xff]
  %v250 = vld [vmem:[%s0 + $0x298] sm:$0xff]
  %v251 = vld [vmem:[%s0 + $0x2a0] sm:$0xff]
  %v252 = vld [vmem:[%s0 + $0x2a8] sm:$0xff]
  %v253 = vld [vmem:[%s0 + $0x2b0] sm:$0xff]
  %v254 = vld [vmem:[%s0 + $0x2b8] sm:$0xff]
  %v255 = vld [vmem:[%s0 + $0x2c0] sm:$0xff]
  %v256 = vld [vmem:[%s0 + $0x2c8] sm:$0xff]
  %v257 = vld [vmem:[%s0 + $0x2d0] sm:$0xff]
  %v258 = vld [vmem:[%s0 + $0x2d8] sm:$0xff]
  %v259 = vld [vmem:[%s0 + $0x2e0] sm:$0xff]
  %v260 = vld [vmem:[%s0 + $0x2e8] sm:$0xff]
  %v261 = vld [vmem:[%s0 + $0x2f0] sm:$0xff]
  %v262 = vld [vmem:[%s0 + $0x2f8] sm:$0xff]
  %v263 = vld [vmem:[%s0 + $0x300] sm:$0xff]
  %v264 = vld [vmem:[%s0 + $0x308] sm:$0xff]
  %v265 = vld [vmem:[%s0 + $0x310] sm:$0xff]
  %v266 = vld [vmem:[%s0 + $0x318] sm:$0xff]
  %v267 = vld [vmem:[%s0 + $0x320] sm:$0xff]
  %v268 = vld [vmem:[%s0 + $0x328] sm:$0xff]
  %v269 = vld [vmem:[%s0 + $0x330] sm:$0xff]
  %v270 = vld [vmem:[%s0 + $0x338] sm:$0xff]
  %v271 = vld [vmem:[%s0 + $0x340] sm:$0xff]
  %v272 = vld [vmem:[%s0 + $0x348] sm:$0xff]
  %v273 = vld [vmem:[%s0 + $0x350] sm:$0xff]
  %v274 = vld [vmem:[%s0 + $0x358] sm:$0xff]
  %v275 = vld [vmem:[%s0 + $0x360] sm:$0xff]
  %v276 = vld [vmem:[%s0 + $0x368] sm:$0xff]
  %v277 = vld [vmem:[%s0 + $0x370] sm:$0xff]
  %v278 = vld [vmem:[%s0 + $0x378] sm:$0xff]
  %v279 = vld [vmem:[%s0 + $0x380] sm:$0xff]
  %v280 = vld [vmem:[%s0 + $0x388] sm:$0xff]
  %v281 = vld [vmem:[%s0 + $0x390] sm:$0xff]
  %v282 = vld [vmem:[%s0 + $0x398] sm:$0xff]
  %v283 = vld [vmem:[%s0 + $0x3a0] sm:$0xff]
  %v284 = vld [vmem:[%s0 + $0x3a8] sm:$0xff]
  %v285 = vld [vmem:[%s0 + $0x3b0] sm:$0xff]
  %v286 = vld [vmem:[%s0 + $0x3b8] sm:$0xff]
  %v287 = vld [vmem:[%s0 + $0x3c0] sm:$0xff]
  %v288 = vld [vmem:[%s0 + $0x3c8] sm:$0xff]
  %v289 = vld [vmem:[%s0 + $0x3d0] sm:$0xff]
  %v290 = vld [vmem:[%s0 + $0x3d8] sm:$0xff]
  %v291 = vld [vmem:[%s0 + $0x3e0] sm:$0xff]
  %v292 = vld [vmem:[%s0 + $0x3e8] sm:$0xff]
  %v293 = vld [vmem:[%s0 + $0x3f0] sm:$0xff]
  %v294 = vld [vmem:[%s0 + $0x3f8] sm:$0xff]
  %v295 = vld [vmem:[#allocation2] sm:$0xff]
  %v296 = vld [vmem:[#allocation2 + $0x8] sm:$0xff]
  %v297 = vld [vmem:[#allocation2 + $0x10] sm:$0xff]
  %v298 = vld [vmem:[#allocation2 + $0x18] sm:$0xff]
  %v299 = vld [vmem:[#allocation2 + $0x20] sm:$0xff]
  %v300 = vld [vmem:[#allocation2 + $0x28] sm:$0xff]
  %v301 = vld [vmem:[#allocation2 + $0x30] sm:$0xff]
  %v302 = vld [vmem:[#allocation2 + $0x38] sm:$0xff]
  %v303 = vld [vmem:[#allocation2 + $0x40] sm:$0xff]
  %v304 = vld [vmem:[#allocation2 + $0x48] sm:$0xff]
  %v305 = vld [vmem:[#allocation2 + $0x50] sm:$0xff]
  %v306 = vld [vmem:[#allocation2 + $0x58] sm:$0xff]
  %v307 = vld [vmem:[#allocation2 + $0x60] sm:$0xff]
  %v308 = vld [vmem:[#allocation2 + $0x68] sm:$0xff]
  %v309 = vld [vmem:[#allocation2 + $0x70] sm:$0xff]
  %v310 = vld [vmem:[#allocation2 + $0x78] sm:$0xff]
  %v311 = vld [vmem:[#allocation2 + $0x80] sm:$0xff]
  %v312 = vld [vmem:[#allocation2 + $0x88] sm:$0xff]
  %v313 = vld [vmem:[#allocation2 + $0x90] sm:$0xff]
  %v314 = vld [vmem:[#allocation2 + $0x98] sm:$0xff]
  %v315 = vld [vmem:[#allocation2 + $0xa0] sm:$0xff]
  %v316 = vld [vmem:[#allocation2 + $0xa8] sm:$0xff]
  %v317 = vld [vmem:[#allocation2 + $0xb0] sm:$0xff]
  %v318 = vld [vmem:[#allocation2 + $0xb8] sm:$0xff]
  %v319 = vld [vmem:[#allocation2 + $0xc0] sm:$0xff]
  %v320 = vld [vmem:[#allocation2 + $0xc8] sm:$0xff]
  %v321 = vld [vmem:[#allocation2 + $0xd0] sm:$0xff]
  %v322 = vld [vmem:[#allocation2 + $0xd8] sm:$0xff]
  %v323 = vld [vmem:[#allocation2 + $0xe0] sm:$0xff]
  %v324 = vld [vmem:[#allocation2 + $0xe8] sm:$0xff]
  %v325 = vld [vmem:[#allocation2 + $0xf0] sm:$0xff]
  %v326 = vld [vmem:[#allocation2 + $0xf8] sm:$0xff]
  %v327 = vld [vmem:[#allocation2 + $0x100] sm:$0xff]
  %v328 = vld [vmem:[#allocation2 + $0x108] sm:$0xff]
  %v329 = vld [vmem:[#allocation2 + $0x110] sm:$0xff]
  %v330 = vld [vmem:[#allocation2 + $0x118] sm:$0xff]
  %v331 = vld [vmem:[#allocation2 + $0x120] sm:$0xff]
  %v332 = vld [vmem:[#allocation2 + $0x128] sm:$0xff]
  %v333 = vld [vmem:[#allocation2 + $0x130] sm:$0xff]
  %v334 = vld [vmem:[#allocation2 + $0x138] sm:$0xff]
  %v335 = vld [vmem:[#allocation2 + $0x140] sm:$0xff]
  %v336 = vld [vmem:[#allocation2 + $0x148] sm:$0xff]
  %v337 = vld [vmem:[#allocation2 + $0x150] sm:$0xff]
  %v338 = vld [vmem:[#allocation2 + $0x158] sm:$0xff]
  %v339 = vld [vmem:[#allocation2 + $0x160] sm:$0xff]
  %v340 = vld [vmem:[#allocation2 + $0x168] sm:$0xff]
  %v341 = vld [vmem:[#allocation2 + $0x170] sm:$0xff]
  %v342 = vld [vmem:[#allocation2 + $0x178] sm:$0xff]
  %v343 = vld [vmem:[#allocation2 + $0x180] sm:$0xff]
  %v344 = vld [vmem:[#allocation2 + $0x188] sm:$0xff]
  %v345 = vld [vmem:[#allocation2 + $0x190] sm:$0xff]
  %v346 = vld [vmem:[#allocation2 + $0x198] sm:$0xff]
  %v347 = vld [vmem:[#allocation2 + $0x1a0] sm:$0xff]
  %v348 = vld [vmem:[#allocation2 + $0x1a8] sm:$0xff]
  %v349 = vld [vmem:[#allocation2 + $0x1b0] sm:$0xff]
  %v350 = vld [vmem:[#allocation2 + $0x1b8] sm:$0xff]
  %v351 = vld [vmem:[#allocation2 + $0x1c0] sm:$0xff]
  %v352 = vld [vmem:[#allocation2 + $0x1c8] sm:$0xff]
  %v353 = vld [vmem:[#allocation2 + $0x1d0] sm:$0xff]
  %v354 = vld [vmem:[#allocation2 + $0x1d8] sm:$0xff]
  %v355 = vld [vmem:[#allocation2 + $0x1e0] sm:$0xff]
  %v356 = vld [vmem:[#allocation2 + $0x1e8] sm:$0xff]
  %v357 = vld [vmem:[#allocation2 + $0x1f0] sm:$0xff]
  %v358 = vld [vmem:[#allocation2 + $0x1f8] sm:$0xff]
  %v359 = vld [vmem:[#allocation2 + $0x200] sm:$0xff]
  %v360 = vld [vmem:[#allocation2 + $0x208] sm:$0xff]
  %v361 = vld [vmem:[#allocation2 + $0x210] sm:$0xff]
  %v362 = vld [vmem:[#allocation2 + $0x218] sm:$0xff]
  %v363 = vld [vmem:[#allocation2 + $0x220] sm:$0xff]
  %v364 = vld [vmem:[#allocation2 + $0x228] sm:$0xff]
  %v365 = vld [vmem:[#allocation2 + $0x230] sm:$0xff]
  %v366 = vld [vmem:[#allocation2 + $0x238] sm:$0xff]
  %v367 = vld [vmem:[#allocation2 + $0x240] sm:$0xff]
  %v368 = vld [vmem:[#allocation2 + $0x248] sm:$0xff]
  %v369 = vld [vmem:[#allocation2 + $0x250] sm:$0xff]
  %v370 = vld [vmem:[#allocation2 + $0x258] sm:$0xff]
  %v371 = vld [vmem:[#allocation2 + $0x260] sm:$0xff]
  %v372 = vld [vmem:[#allocation2 + $0x268] sm:$0xff]
  %v373 = vld [vmem:[#allocation2 + $0x270] sm:$0xff]
  %v374 = vld [vmem:[#allocation2 + $0x278] sm:$0xff]
  %v375 = vld [vmem:[#allocation2 + $0x280] sm:$0xff]
  %v376 = vld [vmem:[#allocation2 + $0x288] sm:$0xff]
  %v377 = vld [vmem:[#allocation2 + $0x290] sm:$0xff]
  %v378 = vld [vmem:[#allocation2 + $0x298] sm:$0xff]
  %v379 = vld [vmem:[#allocation2 + $0x2a0] sm:$0xff]
  %v380 = vld [vmem:[#allocation2 + $0x2a8] sm:$0xff]
  %v381 = vld [vmem:[#allocation2 + $0x2b0] sm:$0xff]
  %v382 = vld [vmem:[#allocation2 + $0x2b8] sm:$0xff]
  %v383 = vld [vmem:[#allocation2 + $0x2c0] sm:$0xff]
  %v384 = vld [vmem:[#allocation2 + $0x2c8] sm:$0xff]
  %v385 = vld [vmem:[#allocation2 + $0x2d0] sm:$0xff]
  %v386 = vld [vmem:[#allocation2 + $0x2d8] sm:$0xff]
  %v387 = vld [vmem:[#allocation2 + $0x2e0] sm:$0xff]
  %v388 = vld [vmem:[#allocation2 + $0x2e8] sm:$0xff]
  %v389 = vld [vmem:[#allocation2 + $0x2f0] sm:$0xff]
  %v390 = vld [vmem:[#allocation2 + $0x2f8] sm:$0xff]
  %v391 = vld [vmem:[#allocation2 + $0x300] sm:$0xff]
  %v392 = vld [vmem:[#allocation2 + $0x308] sm:$0xff]
  %v393 = vld [vmem:[#allocation2 + $0x310] sm:$0xff]
  %v394 = vld [vmem:[#allocation2 + $0x318] sm:$0xff]
  %v395 = vld [vmem:[#allocation2 + $0x320] sm:$0xff]
  %v396 = vld [vmem:[#allocation2 + $0x328] sm:$0xff]
  %v397 = vld [vmem:[#allocation2 + $0x330] sm:$0xff]
  %v398 = vld [vmem:[#allocation2 + $0x338] sm:$0xff]
  %v399 = vld [vmem:[#allocation2 + $0x340] sm:$0xff]
  %v400 = vld [vmem:[#allocation2 + $0x348] sm:$0xff]
  %v401 = vld [vmem:[#allocation2 + $0x350] sm:$0xff]
  %v402 = vld [vmem:[#allocation2 + $0x358] sm:$0xff]
  %v403 = vld [vmem:[#allocation2 + $0x360] sm:$0xff]
  %v404 = vld [vmem:[#allocation2 + $0x368] sm:$0xff]
  %v405 = vld [vmem:[#allocation2 + $0x370] sm:$0xff]
  %v406 = vld [vmem:[#allocation2 + $0x378] sm:$0xff]
  %v407 = vld [vmem:[#allocation2 + $0x380] sm:$0xff]
  %v408 = vld [vmem:[#allocation2 + $0x388] sm:$0xff]
  %v409 = vld [vmem:[#allocation2 + $0x390] sm:$0xff]
  %v410 = vld [vmem:[#allocation2 + $0x398] sm:$0xff]
  %v411 = vld [vmem:[#allocation2 + $0x3a0] sm:$0xff]
  %v412 = vld [vmem:[#allocation2 + $0x3a8] sm:$0xff]
  %v413 = vld [vmem:[#allocation2 + $0x3b0] sm:$0xff]
  %v414 = vld [vmem:[#allocation2 + $0x3b8] sm:$0xff]
  %v415 = vld [vmem:[#allocation2 + $0x3c0] sm:$0xff]
  %v416 = vld [vmem:[#allocation2 + $0x3c8] sm:$0xff]
  %v417 = vld [vmem:[#allocation2 + $0x3d0] sm:$0xff]
  %v418 = vld [vmem:[#allocation2 + $0x3d8] sm:$0xff]
  %v419 = vld [vmem:[#allocation2 + $0x3e0] sm:$0xff]
  %v420 = vld [vmem:[#allocation2 + $0x3e8] sm:$0xff]
  %v421 = vld [vmem:[#allocation2 + $0x3f0] sm:$0xff]
  %v422 = vld [vmem:[#allocation2 + $0x3f8] sm:$0xff]
  %v423 = vadd.f32 %v295, %v167
  %v424 = vadd.f32 %v296, %v168
  %v425 = vadd.f32 %v297, %v169
  %v426 = vadd.f32 %v298, %v170
  %v427 = vadd.f32 %v299, %v171
  %v428 = vadd.f32 %v300, %v172
  %v429 = vadd.f32 %v301, %v173
  %v430 = vadd.f32 %v302, %v174
  %v431 = vadd.f32 %v303, %v175
  %v432 = vadd.f32 %v304, %v176
  %v433 = vadd.f32 %v305, %v177
  %v434 = vadd.f32 %v306, %v178
  %v435 = vadd.f32 %v307, %v179
  %v436 = vadd.f32 %v308, %v180
  %v437 = vadd.f32 %v309, %v181
  %v438 = vadd.f32 %v310, %v182
  %v439 = vadd.f32 %v311, %v183
  %v440 = vadd.f32 %v312, %v184
  %v441 = vadd.f32 %v313, %v185
  %v442 = vadd.f32 %v314, %v186
  %v443 = vadd.f32 %v315, %v187
  %v444 = vadd.f32 %v316, %v188
  %v445 = vadd.f32 %v317, %v189
  %v446 = vadd.f32 %v318, %v190
  %v447 = vadd.f32 %v319, %v191
  %v448 = vadd.f32 %v320, %v192
  %v449 = vadd.f32 %v321, %v193
  %v450 = vadd.f32 %v322, %v194
  %v451 = vadd.f32 %v323, %v195
  %v452 = vadd.f32 %v324, %v196
  %v453 = vadd.f32 %v325, %v197
  %v454 = vadd.f32 %v326, %v198
  %v455 = vadd.f32 %v327, %v199
  %v456 = vadd.f32 %v328, %v200
  %v457 = vadd.f32 %v329, %v201
  %v458 = vadd.f32 %v330, %v202
  %v459 = vadd.f32 %v331, %v203
  %v460 = vadd.f32 %v332, %v204
  %v461 = vadd.f32 %v333, %v205
  %v462 = vadd.f32 %v334, %v206
  %v463 = vadd.f32 %v335, %v207
  %v464 = vadd.f32 %v336, %v208
  %v465 = vadd.f32 %v337, %v209
  %v466 = vadd.f32 %v338, %v210
  %v467 = vadd.f32 %v339, %v211
  %v468 = vadd.f32 %v340, %v212
  %v469 = vadd.f32 %v341, %v213
  %v470 = vadd.f32 %v342, %v214
  %v471 = vadd.f32 %v343, %v215
  %v472 = vadd.f32 %v344, %v216
  %v473 = vadd.f32 %v345, %v217
  %v474 = vadd.f32 %v346, %v218
  %v475 = vadd.f32 %v347, %v219
  %v476 = vadd.f32 %v348, %v220
  %v477 = vadd.f32 %v349, %v221
  %v478 = vadd.f32 %v350, %v222
  %v479 = vadd.f32 %v351, %v223
  %v480 = vadd.f32 %v352, %v224
  %v481 = vadd.f32 %v353, %v225
  %v482 = vadd.f32 %v354, %v226
  %v483 = vadd.f32 %v355, %v227
  %v484 = vadd.f32 %v356, %v228
  %v485 = vadd.f32 %v357, %v229
  %v486 = vadd.f32 %v358, %v230
  %v487 = vadd.f32 %v359, %v231
  %v488 = vadd.f32 %v360, %v232
  %v489 = vadd.f32 %v361, %v233
  %v490 = vadd.f32 %v362, %v234
  %v491 = vadd.f32 %v363, %v235
  %v492 = vadd.f32 %v364, %v236
  %v493 = vadd.f32 %v365, %v237
  %v494 = vadd.f32 %v366, %v238
  %v495 = vadd.f32 %v367, %v239
  %v496 = vadd.f32 %v368, %v240
  %v497 = vadd.f32 %v369, %v241
  %v498 = vadd.f32 %v370, %v242
  %v499 = vadd.f32 %v371, %v243
  %v500 = vadd.f32 %v372, %v244
  %v501 = vadd.f32 %v373, %v245
  %v502 = vadd.f32 %v374, %v246
  %v503 = vadd.f32 %v375, %v247
  %v504 = vadd.f32 %v376, %v248
  %v505 = vadd.f32 %v377, %v249
  %v506 = vadd.f32 %v378, %v250
  %v507 = vadd.f32 %v379, %v251
  %v508 = vadd.f32 %v380, %v252
  %v509 = vadd.f32 %v381, %v253
  %v510 = vadd.f32 %v382, %v254
  %v511 = vadd.f32 %v383, %v255
  %v512 = vadd.f32 %v384, %v256
  %v513 = vadd.f32 %v385, %v257
  %v514 = vadd.f32 %v386, %v258
  %v515 = vadd.f32 %v387, %v259
  %v516 = vadd.f32 %v388, %v260
  %v517 = vadd.f32 %v389, %v261
  %v518 = vadd.f32 %v390, %v262
  %v519 = vadd.f32 %v391, %v263
  %v520 = vadd.f32 %v392, %v264
  %v521 = vadd.f32 %v393, %v265
  %v522 = vadd.f32 %v394, %v266
  %v523 = vadd.f32 %v395, %v267
  %v524 = vadd.f32 %v396, %v268
  %v525 = vadd.f32 %v397, %v269
  %v526 = vadd.f32 %v398, %v270
  %v527 = vadd.f32 %v399, %v271
  %v528 = vadd.f32 %v400, %v272
  %v529 = vadd.f32 %v401, %v273
  %v530 = vadd.f32 %v402, %v274
  %v531 = vadd.f32 %v403, %v275
  %v532 = vadd.f32 %v404, %v276
  %v533 = vadd.f32 %v405, %v277
  %v534 = vadd.f32 %v406, %v278
  %v535 = vadd.f32 %v407, %v279
  %v536 = vadd.f32 %v408, %v280
  %v537 = vadd.f32 %v409, %v281
  %v538 = vadd.f32 %v410, %v282
  %v539 = vadd.f32 %v411, %v283
  %v540 = vadd.f32 %v412, %v284
  %v541 = vadd.f32 %v413, %v285
  %v542 = vadd.f32 %v414, %v286
  %v543 = vadd.f32 %v415, %v287
  %v544 = vadd.f32 %v416, %v288
  %v545 = vadd.f32 %v417, %v289
  %v546 = vadd.f32 %v418, %v290
  %v547 = vadd.f32 %v419, %v291
  %v548 = vadd.f32 %v420, %v292
  %v549 = vadd.f32 %v421, %v293
  %v550 = vadd.f32 %v422, %v294
  %vm551 = vcmask 130048
  %552 = vst.msk [vmem:[#allocation2] sm:$0xff] %vm551, %v423
  %553 = vst.msk [vmem:[#allocation2 + $0x8] sm:$0xff] %vm551, %v424
  %554 = vst.msk [vmem:[#allocation2 + $0x10] sm:$0xff] %vm551, %v425
  %555 = vst.msk [vmem:[#allocation2 + $0x18] sm:$0xff] %vm551, %v426
  %556 = vst.msk [vmem:[#allocation2 + $0x20] sm:$0xff] %vm551, %v427
  %557 = vst.msk [vmem:[#allocation2 + $0x28] sm:$0xff] %vm551, %v428
  %558 = vst.msk [vmem:[#allocation2 + $0x30] sm:$0xff] %vm551, %v429
  %559 = vst.msk [vmem:[#allocation2 + $0x38] sm:$0xff] %vm551, %v430
  %560 = vst.msk [vmem:[#allocation2 + $0x40] sm:$0xff] %vm551, %v431
  %561 = vst.msk [vmem:[#allocation2 + $0x48] sm:$0xff] %vm551, %v432
  %562 = vst.msk [vmem:[#allocation2 + $0x50] sm:$0xff] %vm551, %v433
  %563 = vst.msk [vmem:[#allocation2 + $0x58] sm:$0xff] %vm551, %v434
  %564 = vst.msk [vmem:[#allocation2 + $0x60] sm:$0xff] %vm551, %v435
  %565 = vst.msk [vmem:[#allocation2 + $0x68] sm:$0xff] %vm551, %v436
  %566 = vst.msk [vmem:[#allocation2 + $0x70] sm:$0xff] %vm551, %v437
  %567 = vst.msk [vmem:[#allocation2 + $0x78] sm:$0xff] %vm551, %v438
  %568 = vst.msk [vmem:[#allocation2 + $0x80] sm:$0xff] %vm551, %v439
  %569 = vst.msk [vmem:[#allocation2 + $0x88] sm:$0xff] %vm551, %v440
  %570 = vst.msk [vmem:[#allocation2 + $0x90] sm:$0xff] %vm551, %v441
  %571 = vst.msk [vmem:[#allocation2 + $0x98] sm:$0xff] %vm551, %v442
  %572 = vst.msk [vmem:[#allocation2 + $0xa0] sm:$0xff] %vm551, %v443
  %573 = vst.msk [vmem:[#allocation2 + $0xa8] sm:$0xff] %vm551, %v444
  %574 = vst.msk [vmem:[#allocation2 + $0xb0] sm:$0xff] %vm551, %v445
  %575 = vst.msk [vmem:[#allocation2 + $0xb8] sm:$0xff] %vm551, %v446
  %576 = vst.msk [vmem:[#allocation2 + $0xc0] sm:$0xff] %vm551, %v447
  %577 = vst.msk [vmem:[#allocation2 + $0xc8] sm:$0xff] %vm551, %v448
  %578 = vst.msk [vmem:[#allocation2 + $0xd0] sm:$0xff] %vm551, %v449
  %579 = vst.msk [vmem:[#allocation2 + $0xd8] sm:$0xff] %vm551, %v450
  %580 = vst.msk [vmem:[#allocation2 + $0xe0] sm:$0xff] %vm551, %v451
  %581 = vst.msk [vmem:[#allocation2 + $0xe8] sm:$0xff] %vm551, %v452
  %582 = vst.msk [vmem:[#allocation2 + $0xf0] sm:$0xff] %vm551, %v453
  %583 = vst.msk [vmem:[#allocation2 + $0xf8] sm:$0xff] %vm551, %v454
  %584 = vst.msk [vmem:[#allocation2 + $0x100] sm:$0xff] %vm551, %v455
  %585 = vst.msk [vmem:[#allocation2 + $0x108] sm:$0xff] %vm551, %v456
  %586 = vst.msk [vmem:[#allocation2 + $0x110] sm:$0xff] %vm551, %v457
  %587 = vst.msk [vmem:[#allocation2 + $0x118] sm:$0xff] %vm551, %v458
  %588 = vst.msk [vmem:[#allocation2 + $0x120] sm:$0xff] %vm551, %v459
  %589 = vst.msk [vmem:[#allocation2 + $0x128] sm:$0xff] %vm551, %v460
  %590 = vst.msk [vmem:[#allocation2 + $0x130] sm:$0xff] %vm551, %v461
  %591 = vst.msk [vmem:[#allocation2 + $0x138] sm:$0xff] %vm551, %v462
  %592 = vst.msk [vmem:[#allocation2 + $0x140] sm:$0xff] %vm551, %v463
  %593 = vst.msk [vmem:[#allocation2 + $0x148] sm:$0xff] %vm551, %v464
  %594 = vst.msk [vmem:[#allocation2 + $0x150] sm:$0xff] %vm551, %v465
  %595 = vst.msk [vmem:[#allocation2 + $0x158] sm:$0xff] %vm551, %v466
  %596 = vst.msk [vmem:[#allocation2 + $0x160] sm:$0xff] %vm551, %v467
  %597 = vst.msk [vmem:[#allocation2 + $0x168] sm:$0xff] %vm551, %v468
  %598 = vst.msk [vmem:[#allocation2 + $0x170] sm:$0xff] %vm551, %v469
  %599 = vst.msk [vmem:[#allocation2 + $0x178] sm:$0xff] %vm551, %v470
  %600 = vst.msk [vmem:[#allocation2 + $0x180] sm:$0xff] %vm551, %v471
  %601 = vst.msk [vmem:[#allocation2 + $0x188] sm:$0xff] %vm551, %v472
  %602 = vst.msk [vmem:[#allocation2 + $0x190] sm:$0xff] %vm551, %v473
  %603 = vst.msk [vmem:[#allocation2 + $0x198] sm:$0xff] %vm551, %v474
  %604 = vst.msk [vmem:[#allocation2 + $0x1a0] sm:$0xff] %vm551, %v475
  %605 = vst.msk [vmem:[#allocation2 + $0x1a8] sm:$0xff] %vm551, %v476
  %606 = vst.msk [vmem:[#allocation2 + $0x1b0] sm:$0xff] %vm551, %v477
  %607 = vst.msk [vmem:[#allocation2 + $0x1b8] sm:$0xff] %vm551, %v478
  %608 = vst.msk [vmem:[#allocation2 + $0x1c0] sm:$0xff] %vm551, %v479
  %609 = vst.msk [vmem:[#allocation2 + $0x1c8] sm:$0xff] %vm551, %v480
  %610 = vst.msk [vmem:[#allocation2 + $0x1d0] sm:$0xff] %vm551, %v481
  %611 = vst.msk [vmem:[#allocation2 + $0x1d8] sm:$0xff] %vm551, %v482
  %612 = vst.msk [vmem:[#allocation2 + $0x1e0] sm:$0xff] %vm551, %v483
  %613 = vst.msk [vmem:[#allocation2 + $0x1e8] sm:$0xff] %vm551, %v484
  %614 = vst.msk [vmem:[#allocation2 + $0x1f0] sm:$0xff] %vm551, %v485
  %615 = vst.msk [vmem:[#allocation2 + $0x1f8] sm:$0xff] %vm551, %v486
  %616 = vst.msk [vmem:[#allocation2 + $0x200] sm:$0xff] %vm551, %v487
  %617 = vst.msk [vmem:[#allocation2 + $0x208] sm:$0xff] %vm551, %v488
  %618 = vst.msk [vmem:[#allocation2 + $0x210] sm:$0xff] %vm551, %v489
  %619 = vst.msk [vmem:[#allocation2 + $0x218] sm:$0xff] %vm551, %v490
  %620 = vst.msk [vmem:[#allocation2 + $0x220] sm:$0xff] %vm551, %v491
  %621 = vst.msk [vmem:[#allocation2 + $0x228] sm:$0xff] %vm551, %v492
  %622 = vst.msk [vmem:[#allocation2 + $0x230] sm:$0xff] %vm551, %v493
  %623 = vst.msk [vmem:[#allocation2 + $0x238] sm:$0xff] %vm551, %v494
  %624 = vst.msk [vmem:[#allocation2 + $0x240] sm:$0xff] %vm551, %v495
  %625 = vst.msk [vmem:[#allocation2 + $0x248] sm:$0xff] %vm551, %v496
  %626 = vst.msk [vmem:[#allocation2 + $0x250] sm:$0xff] %vm551, %v497
  %627 = vst.msk [vmem:[#allocation2 + $0x258] sm:$0xff] %vm551, %v498
  %628 = vst.msk [vmem:[#allocation2 + $0x260] sm:$0xff] %vm551, %v499
  %629 = vst.msk [vmem:[#allocation2 + $0x268] sm:$0xff] %vm551, %v500
  %630 = vst.msk [vmem:[#allocation2 + $0x270] sm:$0xff] %vm551, %v501
  %631 = vst.msk [vmem:[#allocation2 + $0x278] sm:$0xff] %vm551, %v502
  %632 = vst.msk [vmem:[#allocation2 + $0x280] sm:$0xff] %vm551, %v503
  %633 = vst.msk [vmem:[#allocation2 + $0x288] sm:$0xff] %vm551, %v504
  %634 = vst.msk [vmem:[#allocation2 + $0x290] sm:$0xff] %vm551, %v505
  %635 = vst.msk [vmem:[#allocation2 + $0x298] sm:$0xff] %vm551, %v506
  %636 = vst.msk [vmem:[#allocation2 + $0x2a0] sm:$0xff] %vm551, %v507
  %637 = vst.msk [vmem:[#allocation2 + $0x2a8] sm:$0xff] %vm551, %v508
  %638 = vst.msk [vmem:[#allocation2 + $0x2b0] sm:$0xff] %vm551, %v509
  %639 = vst.msk [vmem:[#allocation2 + $0x2b8] sm:$0xff] %vm551, %v510
  %640 = vst.msk [vmem:[#allocation2 + $0x2c0] sm:$0xff] %vm551, %v511
  %641 = vst.msk [vmem:[#allocation2 + $0x2c8] sm:$0xff] %vm551, %v512
  %642 = vst.msk [vmem:[#allocation2 + $0x2d0] sm:$0xff] %vm551, %v513
  %643 = vst.msk [vmem:[#allocation2 + $0x2d8] sm:$0xff] %vm551, %v514
  %644 = vst.msk [vmem:[#allocation2 + $0x2e0] sm:$0xff] %vm551, %v515
  %645 = vst.msk [vmem:[#allocation2 + $0x2e8] sm:$0xff] %vm551, %v516
  %646 = vst.msk [vmem:[#allocation2 + $0x2f0] sm:$0xff] %vm551, %v517
  %647 = vst.msk [vmem:[#allocation2 + $0x2f8] sm:$0xff] %vm551, %v518
  %648 = vst.msk [vmem:[#allocation2 + $0x300] sm:$0xff] %vm551, %v519
  %649 = vst.msk [vmem:[#allocation2 + $0x308] sm:$0xff] %vm551, %v520
  %650 = vst.msk [vmem:[#allocation2 + $0x310] sm:$0xff] %vm551, %v521
  %651 = vst.msk [vmem:[#allocation2 + $0x318] sm:$0xff] %vm551, %v522
  %652 = vst.msk [vmem:[#allocation2 + $0x320] sm:$0xff] %vm551, %v523
  %653 = vst.msk [vmem:[#allocation2 + $0x328] sm:$0xff] %vm551, %v524
  %654 = vst.msk [vmem:[#allocation2 + $0x330] sm:$0xff] %vm551, %v525
  %655 = vst.msk [vmem:[#allocation2 + $0x338] sm:$0xff] %vm551, %v526
  %656 = vst.msk [vmem:[#allocation2 + $0x340] sm:$0xff] %vm551, %v527
  %657 = vst.msk [vmem:[#allocation2 + $0x348] sm:$0xff] %vm551, %v528
  %658 = vst.msk [vmem:[#allocation2 + $0x350] sm:$0xff] %vm551, %v529
  %659 = vst.msk [vmem:[#allocation2 + $0x358] sm:$0xff] %vm551, %v530
  %660 = vst.msk [vmem:[#allocation2 + $0x360] sm:$0xff] %vm551, %v531
  %661 = vst.msk [vmem:[#allocation2 + $0x368] sm:$0xff] %vm551, %v532
  %662 = vst.msk [vmem:[#allocation2 + $0x370] sm:$0xff] %vm551, %v533
  %663 = vst.msk [vmem:[#allocation2 + $0x378] sm:$0xff] %vm551, %v534
  %664 = vst.msk [vmem:[#allocation2 + $0x380] sm:$0xff] %vm551, %v535
  %665 = vst.msk [vmem:[#allocation2 + $0x388] sm:$0xff] %vm551, %v536
  %666 = vst.msk [vmem:[#allocation2 + $0x390] sm:$0xff] %vm551, %v537
  %667 = vst.msk [vmem:[#allocation2 + $0x398] sm:$0xff] %vm551, %v538
  %668 = vst.msk [vmem:[#allocation2 + $0x3a0] sm:$0xff] %vm551, %v539
  %669 = vst.msk [vmem:[#allocation2 + $0x3a8] sm:$0xff] %vm551, %v540
  %670 = vst.msk [vmem:[#allocation2 + $0x3b0] sm:$0xff] %vm551, %v541
  %671 = vst.msk [vmem:[#allocation2 + $0x3b8] sm:$0xff] %vm551, %v542
  %672 = vst.msk [vmem:[#allocation2 + $0x3c0] sm:$0xff] %vm551, %v543
  %673 = vst.msk [vmem:[#allocation2 + $0x3c8] sm:$0xff] %vm551, %v544
  %674 = vst.msk [vmem:[#allocation2 + $0x3d0] sm:$0xff] %vm551, %v545
  %675 = vst.msk [vmem:[#allocation2 + $0x3d8] sm:$0xff] %vm551, %v546
  %676 = vst.msk [vmem:[#allocation2 + $0x3e0] sm:$0xff] %vm551, %v547
  %677 = vst.msk [vmem:[#allocation2 + $0x3e8] sm:$0xff] %vm551, %v548
  %678 = vst.msk [vmem:[#allocation2 + $0x3f0] sm:$0xff] %vm551, %v549
  %679 = vst.msk [vmem:[#allocation2 + $0x3f8] sm:$0xff] %vm551, %v550
  // Predicated region
  $region42: #{tpu_custom_call.1} parent=0 // pred_check
    %p680 = pneg %p34
  $region43: #{tpu_custom_call.1} parent=0 // pred_check_branch
    %682 = sbr.rel (%p680) target = $region45
  $region44: #{tpu_custom_call.1} parent=0 // pred_region
    %v683 = vld [vmem:[#allocation2] sm:$0xff]
    %v684 = vld [vmem:[#allocation2 + $0x8] sm:$0xff]
    %v685 = vld [vmem:[#allocation2 + $0x10] sm:$0xff]
    %v686 = vld [vmem:[#allocation2 + $0x18] sm:$0xff]
    %v687 = vld [vmem:[#allocation2 + $0x20] sm:$0xff]
    %v688 = vld [vmem:[#allocation2 + $0x28] sm:$0xff]
    %v689 = vld [vmem:[#allocation2 + $0x30] sm:$0xff]
    %v690 = vld [vmem:[#allocation2 + $0x38] sm:$0xff]
    %v691 = vld [vmem:[#allocation2 + $0x40] sm:$0xff]
    %v692 = vld [vmem:[#allocation2 + $0x48] sm:$0xff]
    %v693 = vld [vmem:[#allocation2 + $0x50] sm:$0xff]
    %v694 = vld [vmem:[#allocation2 + $0x58] sm:$0xff]
    %v695 = vld [vmem:[#allocation2 + $0x60] sm:$0xff]
    %v696 = vld [vmem:[#allocation2 + $0x68] sm:$0xff]
    %v697 = vld [vmem:[#allocation2 + $0x70] sm:$0xff]
    %v698 = vld [vmem:[#allocation2 + $0x78] sm:$0xff]
    %v699 = vld [vmem:[#allocation2 + $0x80] sm:$0xff]
    %v700 = vld [vmem:[#allocation2 + $0x88] sm:$0xff]
    %v701 = vld [vmem:[#allocation2 + $0x90] sm:$0xff]
    %v702 = vld [vmem:[#allocation2 + $0x98] sm:$0xff]
    %v703 = vld [vmem:[#allocation2 + $0xa0] sm:$0xff]
    %v704 = vld [vmem:[#allocation2 + $0xa8] sm:$0xff]
    %v705 = vld [vmem:[#allocation2 + $0xb0] sm:$0xff]
    %v706 = vld [vmem:[#allocation2 + $0xb8] sm:$0xff]
    %v707 = vld [vmem:[#allocation2 + $0xc0] sm:$0xff]
    %v708 = vld [vmem:[#allocation2 + $0xc8] sm:$0xff]
    %v709 = vld [vmem:[#allocation2 + $0xd0] sm:$0xff]
    %v710 = vld [vmem:[#allocation2 + $0xd8] sm:$0xff]
    %v711 = vld [vmem:[#allocation2 + $0xe0] sm:$0xff]
    %v712 = vld [vmem:[#allocation2 + $0xe8] sm:$0xff]
    %v713 = vld [vmem:[#allocation2 + $0xf0] sm:$0xff]
    %v714 = vld [vmem:[#allocation2 + $0xf8] sm:$0xff]
    %v715 = vld [vmem:[#allocation2 + $0x100] sm:$0xff]
    %v716 = vld [vmem:[#allocation2 + $0x108] sm:$0xff]
    %v717 = vld [vmem:[#allocation2 + $0x110] sm:$0xff]
    %v718 = vld [vmem:[#allocation2 + $0x118] sm:$0xff]
    %v719 = vld [vmem:[#allocation2 + $0x120] sm:$0xff]
    %v720 = vld [vmem:[#allocation2 + $0x128] sm:$0xff]
    %v721 = vld [vmem:[#allocation2 + $0x130] sm:$0xff]
    %v722 = vld [vmem:[#allocation2 + $0x138] sm:$0xff]
    %v723 = vld [vmem:[#allocation2 + $0x140] sm:$0xff]
    %v724 = vld [vmem:[#allocation2 + $0x148] sm:$0xff]
    %v725 = vld [vmem:[#allocation2 + $0x150] sm:$0xff]
    %v726 = vld [vmem:[#allocation2 + $0x158] sm:$0xff]
    %v727 = vld [vmem:[#allocation2 + $0x160] sm:$0xff]
    %v728 = vld [vmem:[#allocation2 + $0x168] sm:$0xff]
    %v729 = vld [vmem:[#allocation2 + $0x170] sm:$0xff]
    %v730 = vld [vmem:[#allocation2 + $0x178] sm:$0xff]
    %v731 = vld [vmem:[#allocation2 + $0x180] sm:$0xff]
    %v732 = vld [vmem:[#allocation2 + $0x188] sm:$0xff]
    %v733 = vld [vmem:[#allocation2 + $0x190] sm:$0xff]
    %v734 = vld [vmem:[#allocation2 + $0x198] sm:$0xff]
    %v735 = vld [vmem:[#allocation2 + $0x1a0] sm:$0xff]
    %v736 = vld [vmem:[#allocation2 + $0x1a8] sm:$0xff]
    %v737 = vld [vmem:[#allocation2 + $0x1b0] sm:$0xff]
    %v738 = vld [vmem:[#allocation2 + $0x1b8] sm:$0xff]
    %v739 = vld [vmem:[#allocation2 + $0x1c0] sm:$0xff]
    %v740 = vld [vmem:[#allocation2 + $0x1c8] sm:$0xff]
    %v741 = vld [vmem:[#allocation2 + $0x1d0] sm:$0xff]
    %v742 = vld [vmem:[#allocation2 + $0x1d8] sm:$0xff]
    %v743 = vld [vmem:[#allocation2 + $0x1e0] sm:$0xff]
    %v744 = vld [vmem:[#allocation2 + $0x1e8] sm:$0xff]
    %v745 = vld [vmem:[#allocation2 + $0x1f0] sm:$0xff]
    %v746 = vld [vmem:[#allocation2 + $0x1f8] sm:$0xff]
    %v747 = vld [vmem:[#allocation2 + $0x200] sm:$0xff]
    %v748 = vld [vmem:[#allocation2 + $0x208] sm:$0xff]
    %v749 = vld [vmem:[#allocation2 + $0x210] sm:$0xff]
    %v750 = vld [vmem:[#allocation2 + $0x218] sm:$0xff]
    %v751 = vld [vmem:[#allocation2 + $0x220] sm:$0xff]
    %v752 = vld [vmem:[#allocation2 + $0x228] sm:$0xff]
    %v753 = vld [vmem:[#allocation2 + $0x230] sm:$0xff]
    %v754 = vld [vmem:[#allocation2 + $0x238] sm:$0xff]
    %v755 = vld [vmem:[#allocation2 + $0x240] sm:$0xff]
    %v756 = vld [vmem:[#allocation2 + $0x248] sm:$0xff]
    %v757 = vld [vmem:[#allocation2 + $0x250] sm:$0xff]
    %v758 = vld [vmem:[#allocation2 + $0x258] sm:$0xff]
    %v759 = vld [vmem:[#allocation2 + $0x260] sm:$0xff]
    %v760 = vld [vmem:[#allocation2 + $0x268] sm:$0xff]
    %v761 = vld [vmem:[#allocation2 + $0x270] sm:$0xff]
    %v762 = vld [vmem:[#allocation2 + $0x278] sm:$0xff]
    %v763 = vld [vmem:[#allocation2 + $0x280] sm:$0xff]
    %v764 = vld [vmem:[#allocation2 + $0x288] sm:$0xff]
    %v765 = vld [vmem:[#allocation2 + $0x290] sm:$0xff]
    %v766 = vld [vmem:[#allocation2 + $0x298] sm:$0xff]
    %v767 = vld [vmem:[#allocation2 + $0x2a0] sm:$0xff]
    %v768 = vld [vmem:[#allocation2 + $0x2a8] sm:$0xff]
    %v769 = vld [vmem:[#allocation2 + $0x2b0] sm:$0xff]
    %v770 = vld [vmem:[#allocation2 + $0x2b8] sm:$0xff]
    %v771 = vld [vmem:[#allocation2 + $0x2c0] sm:$0xff]
    %v772 = vld [vmem:[#allocation2 + $0x2c8] sm:$0xff]
    %v773 = vld [vmem:[#allocation2 + $0x2d0] sm:$0xff]
    %v774 = vld [vmem:[#allocation2 + $0x2d8] sm:$0xff]
    %v775 = vld [vmem:[#allocation2 + $0x2e0] sm:$0xff]
    %v776 = vld [vmem:[#allocation2 + $0x2e8] sm:$0xff]
    %v777 = vld [vmem:[#allocation2 + $0x2f0] sm:$0xff]
    %v778 = vld [vmem:[#allocation2 + $0x2f8] sm:$0xff]
    %v779 = vld [vmem:[#allocation2 + $0x300] sm:$0xff]
    %v780 = vld [vmem:[#allocation2 + $0x308] sm:$0xff]
    %v781 = vld [vmem:[#allocation2 + $0x310] sm:$0xff]
    %v782 = vld [vmem:[#allocation2 + $0x318] sm:$0xff]
    %v783 = vld [vmem:[#allocation2 + $0x320] sm:$0xff]
    %v784 = vld [vmem:[#allocation2 + $0x328] sm:$0xff]
    %v785 = vld [vmem:[#allocation2 + $0x330] sm:$0xff]
    %v786 = vld [vmem:[#allocation2 + $0x338] sm:$0xff]
    %v787 = vld [vmem:[#allocation2 + $0x340] sm:$0xff]
    %v788 = vld [vmem:[#allocation2 + $0x348] sm:$0xff]
    %v789 = vld [vmem:[#allocation2 + $0x350] sm:$0xff]
    %v790 = vld [vmem:[#allocation2 + $0x358] sm:$0xff]
    %v791 = vld [vmem:[#allocation2 + $0x360] sm:$0xff]
    %v792 = vld [vmem:[#allocation2 + $0x368] sm:$0xff]
    %v793 = vld [vmem:[#allocation2 + $0x370] sm:$0xff]
    %v794 = vld [vmem:[#allocation2 + $0x378] sm:$0xff]
    %v795 = vld [vmem:[#allocation2 + $0x380] sm:$0xff]
    %v796 = vld [vmem:[#allocation2 + $0x388] sm:$0xff]
    %v797 = vld [vmem:[#allocation2 + $0x390] sm:$0xff]
    %v798 = vld [vmem:[#allocation2 + $0x398] sm:$0xff]
    %v799 = vld [vmem:[#allocation2 + $0x3a0] sm:$0xff]
    %v800 = vld [vmem:[#allocation2 + $0x3a8] sm:$0xff]
    %v801 = vld [vmem:[#allocation2 + $0x3b0] sm:$0xff]
    %v802 = vld [vmem:[#allocation2 + $0x3b8] sm:$0xff]
    %v803 = vld [vmem:[#allocation2 + $0x3c0] sm:$0xff]
    %v804 = vld [vmem:[#allocation2 + $0x3c8] sm:$0xff]
    %v805 = vld [vmem:[#allocation2 + $0x3d0] sm:$0xff]
    %v806 = vld [vmem:[#allocation2 + $0x3d8] sm:$0xff]
    %v807 = vld [vmem:[#allocation2 + $0x3e0] sm:$0xff]
    %v808 = vld [vmem:[#allocation2 + $0x3e8] sm:$0xff]
    %v809 = vld [vmem:[#allocation2 + $0x3f0] sm:$0xff]
    %v810 = vld [vmem:[#allocation2 + $0x3f8] sm:$0xff]
    %v811 = vsel %vm551, %v683, 0.0
    %812 = vadd.xlane.f32.xlu0 %v811
    %v813 = vpop.xlane.xlu0 %812
    %v814 = vsel %vm551, %v684, 0.0
    %815 = vadd.xlane.f32.xlu0 %v814
    %v816 = vpop.xlane.xlu0 %815
    %v817 = vsel %vm551, %v685, 0.0
    %818 = vadd.xlane.f32.xlu0 %v817
    %v819 = vpop.xlane.xlu0 %818
    %v820 = vsel %vm551, %v686, 0.0
    %821 = vadd.xlane.f32.xlu0 %v820
    %v822 = vpop.xlane.xlu0 %821
    %v823 = vsel %vm551, %v687, 0.0
    %824 = vadd.xlane.f32.xlu0 %v823
    %v825 = vpop.xlane.xlu0 %824
    %v826 = vsel %vm551, %v688, 0.0
    %827 = vadd.xlane.f32.xlu0 %v826
    %v828 = vpop.xlane.xlu0 %827
    %v829 = vsel %vm551, %v689, 0.0
    %830 = vadd.xlane.f32.xlu0 %v829
    %v831 = vpop.xlane.xlu0 %830
    %v832 = vsel %vm551, %v690, 0.0
    %833 = vadd.xlane.f32.xlu0 %v832
    %v834 = vpop.xlane.xlu0 %833
    %v835 = vsel %vm551, %v691, 0.0
    %836 = vadd.xlane.f32.xlu0 %v835
    %v837 = vpop.xlane.xlu0 %836
    %v838 = vsel %vm551, %v692, 0.0
    %839 = vadd.xlane.f32.xlu0 %v838
    %v840 = vpop.xlane.xlu0 %839
    %v841 = vsel %vm551, %v693, 0.0
    %842 = vadd.xlane.f32.xlu0 %v841
    %v843 = vpop.xlane.xlu0 %842
    %v844 = vsel %vm551, %v694, 0.0
    %845 = vadd.xlane.f32.xlu0 %v844
    %v846 = vpop.xlane.xlu0 %845
    %v847 = vsel %vm551, %v695, 0.0
    %848 = vadd.xlane.f32.xlu0 %v847
    %v849 = vpop.xlane.xlu0 %848
    %v850 = vsel %vm551, %v696, 0.0
    %851 = vadd.xlane.f32.xlu0 %v850
    %v852 = vpop.xlane.xlu0 %851
    %v853 = vsel %vm551, %v697, 0.0
    %854 = vadd.xlane.f32.xlu0 %v853
    %v855 = vpop.xlane.xlu0 %854
    %v856 = vsel %vm551, %v698, 0.0
    %857 = vadd.xlane.f32.xlu0 %v856
    %v858 = vpop.xlane.xlu0 %857
    %v859 = vsel %vm551, %v699, 0.0
    %860 = vadd.xlane.f32.xlu0 %v859
    %v861 = vpop.xlane.xlu0 %860
    %v862 = vsel %vm551, %v700, 0.0
    %863 = vadd.xlane.f32.xlu0 %v862
    %v864 = vpop.xlane.xlu0 %863
    %v865 = vsel %vm551, %v701, 0.0
    %866 = vadd.xlane.f32.xlu0 %v865
    %v867 = vpop.xlane.xlu0 %866
    %v868 = vsel %vm551, %v702, 0.0
    %869 = vadd.xlane.f32.xlu0 %v868
    %v870 = vpop.xlane.xlu0 %869
    %v871 = vsel %vm551, %v703, 0.0
    %872 = vadd.xlane.f32.xlu0 %v871
    %v873 = vpop.xlane.xlu0 %872
    %v874 = vsel %vm551, %v704, 0.0
    %875 = vadd.xlane.f32.xlu0 %v874
    %v876 = vpop.xlane.xlu0 %875
    %v877 = vsel %vm551, %v705, 0.0
    %878 = vadd.xlane.f32.xlu0 %v877
    %v879 = vpop.xlane.xlu0 %878
    %v880 = vsel %vm551, %v706, 0.0
    %881 = vadd.xlane.f32.xlu0 %v880
    %v882 = vpop.xlane.xlu0 %881
    %v883 = vsel %vm551, %v707, 0.0
    %884 = vadd.xlane.f32.xlu0 %v883
    %v885 = vpop.xlane.xlu0 %884
    %v886 = vsel %vm551, %v708, 0.0
    %887 = vadd.xlane.f32.xlu0 %v886
    %v888 = vpop.xlane.xlu0 %887
    %v889 = vsel %vm551, %v709, 0.0
    %890 = vadd.xlane.f32.xlu0 %v889
    %v891 = vpop.xlane.xlu0 %890
    %v892 = vsel %vm551, %v710, 0.0
    %893 = vadd.xlane.f32.xlu0 %v892
    %v894 = vpop.xlane.xlu0 %893
    %v895 = vsel %vm551, %v711, 0.0
    %896 = vadd.xlane.f32.xlu0 %v895
    %v897 = vpop.xlane.xlu0 %896
    %v898 = vsel %vm551, %v712, 0.0
    %899 = vadd.xlane.f32.xlu0 %v898
    %v900 = vpop.xlane.xlu0 %899
    %v901 = vsel %vm551, %v713, 0.0
    %902 = vadd.xlane.f32.xlu0 %v901
    %v903 = vpop.xlane.xlu0 %902
    %v904 = vsel %vm551, %v714, 0.0
    %905 = vadd.xlane.f32.xlu0 %v904
    %v906 = vpop.xlane.xlu0 %905
    %v907 = vsel %vm551, %v715, 0.0
    %908 = vadd.xlane.f32.xlu0 %v907
    %v909 = vpop.xlane.xlu0 %908
    %v910 = vsel %vm551, %v716, 0.0
    %911 = vadd.xlane.f32.xlu0 %v910
    %v912 = vpop.xlane.xlu0 %911
    %v913 = vsel %vm551, %v717, 0.0
    %914 = vadd.xlane.f32.xlu0 %v913
    %v915 = vpop.xlane.xlu0 %914
    %v916 = vsel %vm551, %v718, 0.0
    %917 = vadd.xlane.f32.xlu0 %v916
    %v918 = vpop.xlane.xlu0 %917
    %v919 = vsel %vm551, %v719, 0.0
    %920 = vadd.xlane.f32.xlu0 %v919
    %v921 = vpop.xlane.xlu0 %920
    %v922 = vsel %vm551, %v720, 0.0
    %923 = vadd.xlane.f32.xlu0 %v922
    %v924 = vpop.xlane.xlu0 %923
    %v925 = vsel %vm551, %v721, 0.0
    %926 = vadd.xlane.f32.xlu0 %v925
    %v927 = vpop.xlane.xlu0 %926
    %v928 = vsel %vm551, %v722, 0.0
    %929 = vadd.xlane.f32.xlu0 %v928
    %v930 = vpop.xlane.xlu0 %929
    %v931 = vsel %vm551, %v723, 0.0
    %932 = vadd.xlane.f32.xlu0 %v931
    %v933 = vpop.xlane.xlu0 %932
    %v934 = vsel %vm551, %v724, 0.0
    %935 = vadd.xlane.f32.xlu0 %v934
    %v936 = vpop.xlane.xlu0 %935
    %v937 = vsel %vm551, %v725, 0.0
    %938 = vadd.xlane.f32.xlu0 %v937
    %v939 = vpop.xlane.xlu0 %938
    %v940 = vsel %vm551, %v726, 0.0
    %941 = vadd.xlane.f32.xlu0 %v940
    %v942 = vpop.xlane.xlu0 %941
    %v943 = vsel %vm551, %v727, 0.0
    %944 = vadd.xlane.f32.xlu0 %v943
    %v945 = vpop.xlane.xlu0 %944
    %v946 = vsel %vm551, %v728, 0.0
    %947 = vadd.xlane.f32.xlu0 %v946
    %v948 = vpop.xlane.xlu0 %947
    %v949 = vsel %vm551, %v729, 0.0
    %950 = vadd.xlane.f32.xlu0 %v949
    %v951 = vpop.xlane.xlu0 %950
    %v952 = vsel %vm551, %v730, 0.0
    %953 = vadd.xlane.f32.xlu0 %v952
    %v954 = vpop.xlane.xlu0 %953
    %v955 = vsel %vm551, %v731, 0.0
    %956 = vadd.xlane.f32.xlu0 %v955
    %v957 = vpop.xlane.xlu0 %956
    %v958 = vsel %vm551, %v732, 0.0
    %959 = vadd.xlane.f32.xlu0 %v958
    %v960 = vpop.xlane.xlu0 %959
    %v961 = vsel %vm551, %v733, 0.0
    %962 = vadd.xlane.f32.xlu0 %v961
    %v963 = vpop.xlane.xlu0 %962
    %v964 = vsel %vm551, %v734, 0.0
    %965 = vadd.xlane.f32.xlu0 %v964
    %v966 = vpop.xlane.xlu0 %965
    %v967 = vsel %vm551, %v735, 0.0
    %968 = vadd.xlane.f32.xlu0 %v967
    %v969 = vpop.xlane.xlu0 %968
    %v970 = vsel %vm551, %v736, 0.0
    %971 = vadd.xlane.f32.xlu0 %v970
    %v972 = vpop.xlane.xlu0 %971
    %v973 = vsel %vm551, %v737, 0.0
    %974 = vadd.xlane.f32.xlu0 %v973
    %v975 = vpop.xlane.xlu0 %974
    %v976 = vsel %vm551, %v738, 0.0
    %977 = vadd.xlane.f32.xlu0 %v976
    %v978 = vpop.xlane.xlu0 %977
    %v979 = vsel %vm551, %v739, 0.0
    %980 = vadd.xlane.f32.xlu0 %v979
    %v981 = vpop.xlane.xlu0 %980
    %v982 = vsel %vm551, %v740, 0.0
    %983 = vadd.xlane.f32.xlu0 %v982
    %v984 = vpop.xlane.xlu0 %983
    %v985 = vsel %vm551, %v741, 0.0
    %986 = vadd.xlane.f32.xlu0 %v985
    %v987 = vpop.xlane.xlu0 %986
    %v988 = vsel %vm551, %v742, 0.0
    %989 = vadd.xlane.f32.xlu0 %v988
    %v990 = vpop.xlane.xlu0 %989
    %v991 = vsel %vm551, %v743, 0.0
    %992 = vadd.xlane.f32.xlu0 %v991
    %v993 = vpop.xlane.xlu0 %992
    %v994 = vsel %vm551, %v744, 0.0
    %995 = vadd.xlane.f32.xlu0 %v994
    %v996 = vpop.xlane.xlu0 %995
    %v997 = vsel %vm551, %v745, 0.0
    %998 = vadd.xlane.f32.xlu0 %v997
    %v999 = vpop.xlane.xlu0 %998
    %v1000 = vsel %vm551, %v746, 0.0
    %1001 = vadd.xlane.f32.xlu0 %v1000
    %v1002 = vpop.xlane.xlu0 %1001
    %v1003 = vsel %vm551, %v747, 0.0
    %1004 = vadd.xlane.f32.xlu0 %v1003
    %v1005 = vpop.xlane.xlu0 %1004
    %v1006 = vsel %vm551, %v748, 0.0
    %1007 = vadd.xlane.f32.xlu0 %v1006
    %v1008 = vpop.xlane.xlu0 %1007
    %v1009 = vsel %vm551, %v749, 0.0
    %1010 = vadd.xlane.f32.xlu0 %v1009
    %v1011 = vpop.xlane.xlu0 %1010
    %v1012 = vsel %vm551, %v750, 0.0
    %1013 = vadd.xlane.f32.xlu0 %v1012
    %v1014 = vpop.xlane.xlu0 %1013
    %v1015 = vsel %vm551, %v751, 0.0
    %1016 = vadd.xlane.f32.xlu0 %v1015
    %v1017 = vpop.xlane.xlu0 %1016
    %v1018 = vsel %vm551, %v752, 0.0
    %1019 = vadd.xlane.f32.xlu0 %v1018
    %v1020 = vpop.xlane.xlu0 %1019
    %v1021 = vsel %vm551, %v753, 0.0
    %1022 = vadd.xlane.f32.xlu0 %v1021
    %v1023 = vpop.xlane.xlu0 %1022
    %v1024 = vsel %vm551, %v754, 0.0
    %1025 = vadd.xlane.f32.xlu0 %v1024
    %v1026 = vpop.xlane.xlu0 %1025
    %v1027 = vsel %vm551, %v755, 0.0
    %1028 = vadd.xlane.f32.xlu0 %v1027
    %v1029 = vpop.xlane.xlu0 %1028
    %v1030 = vsel %vm551, %v756, 0.0
    %1031 = vadd.xlane.f32.xlu0 %v1030
    %v1032 = vpop.xlane.xlu0 %1031
    %v1033 = vsel %vm551, %v757, 0.0
    %1034 = vadd.xlane.f32.xlu0 %v1033
    %v1035 = vpop.xlane.xlu0 %1034
    %v1036 = vsel %vm551, %v758, 0.0
    %1037 = vadd.xlane.f32.xlu0 %v1036
    %v1038 = vpop.xlane.xlu0 %1037
    %v1039 = vsel %vm551, %v759, 0.0
    %1040 = vadd.xlane.f32.xlu0 %v1039
    %v1041 = vpop.xlane.xlu0 %1040
    %v1042 = vsel %vm551, %v760, 0.0
    %1043 = vadd.xlane.f32.xlu0 %v1042
    %v1044 = vpop.xlane.xlu0 %1043
    %v1045 = vsel %vm551, %v761, 0.0
    %1046 = vadd.xlane.f32.xlu0 %v1045
    %v1047 = vpop.xlane.xlu0 %1046
    %v1048 = vsel %vm551, %v762, 0.0
    %1049 = vadd.xlane.f32.xlu0 %v1048
    %v1050 = vpop.xlane.xlu0 %1049
    %v1051 = vsel %vm551, %v763, 0.0
    %1052 = vadd.xlane.f32.xlu0 %v1051
    %v1053 = vpop.xlane.xlu0 %1052
    %v1054 = vsel %vm551, %v764, 0.0
    %1055 = vadd.xlane.f32.xlu0 %v1054
    %v1056 = vpop.xlane.xlu0 %1055
    %v1057 = vsel %vm551, %v765, 0.0
    %1058 = vadd.xlane.f32.xlu0 %v1057
    %v1059 = vpop.xlane.xlu0 %1058
    %v1060 = vsel %vm551, %v766, 0.0
    %1061 = vadd.xlane.f32.xlu0 %v1060
    %v1062 = vpop.xlane.xlu0 %1061
    %v1063 = vsel %vm551, %v767, 0.0
    %1064 = vadd.xlane.f32.xlu0 %v1063
    %v1065 = vpop.xlane.xlu0 %1064
    %v1066 = vsel %vm551, %v768, 0.0
    %1067 = vadd.xlane.f32.xlu0 %v1066
    %v1068 = vpop.xlane.xlu0 %1067
    %v1069 = vsel %vm551, %v769, 0.0
    %1070 = vadd.xlane.f32.xlu0 %v1069
    %v1071 = vpop.xlane.xlu0 %1070
    %v1072 = vsel %vm551, %v770, 0.0
    %1073 = vadd.xlane.f32.xlu0 %v1072
    %v1074 = vpop.xlane.xlu0 %1073
    %v1075 = vsel %vm551, %v771, 0.0
    %1076 = vadd.xlane.f32.xlu0 %v1075
    %v1077 = vpop.xlane.xlu0 %1076
    %v1078 = vsel %vm551, %v772, 0.0
    %1079 = vadd.xlane.f32.xlu0 %v1078
    %v1080 = vpop.xlane.xlu0 %1079
    %v1081 = vsel %vm551, %v773, 0.0
    %1082 = vadd.xlane.f32.xlu0 %v1081
    %v1083 = vpop.xlane.xlu0 %1082
    %v1084 = vsel %vm551, %v774, 0.0
    %1085 = vadd.xlane.f32.xlu0 %v1084
    %v1086 = vpop.xlane.xlu0 %1085
    %v1087 = vsel %vm551, %v775, 0.0
    %1088 = vadd.xlane.f32.xlu0 %v1087
    %v1089 = vpop.xlane.xlu0 %1088
    %v1090 = vsel %vm551, %v776, 0.0
    %1091 = vadd.xlane.f32.xlu0 %v1090
    %v1092 = vpop.xlane.xlu0 %1091
    %v1093 = vsel %vm551, %v777, 0.0
    %1094 = vadd.xlane.f32.xlu0 %v1093
    %v1095 = vpop.xlane.xlu0 %1094
    %v1096 = vsel %vm551, %v778, 0.0
    %1097 = vadd.xlane.f32.xlu0 %v1096
    %v1098 = vpop.xlane.xlu0 %1097
    %v1099 = vsel %vm551, %v779, 0.0
    %1100 = vadd.xlane.f32.xlu0 %v1099
    %v1101 = vpop.xlane.xlu0 %1100
    %v1102 = vsel %vm551, %v780, 0.0
    %1103 = vadd.xlane.f32.xlu0 %v1102
    %v1104 = vpop.xlane.xlu0 %1103
    %v1105 = vsel %vm551, %v781, 0.0
    %1106 = vadd.xlane.f32.xlu0 %v1105
    %v1107 = vpop.xlane.xlu0 %1106
    %v1108 = vsel %vm551, %v782, 0.0
    %1109 = vadd.xlane.f32.xlu0 %v1108
    %v1110 = vpop.xlane.xlu0 %1109
    %v1111 = vsel %vm551, %v783, 0.0
    %1112 = vadd.xlane.f32.xlu0 %v1111
    %v1113 = vpop.xlane.xlu0 %1112
    %v1114 = vsel %vm551, %v784, 0.0
    %1115 = vadd.xlane.f32.xlu0 %v1114
    %v1116 = vpop.xlane.xlu0 %1115
    %v1117 = vsel %vm551, %v785, 0.0
    %1118 = vadd.xlane.f32.xlu0 %v1117
    %v1119 = vpop.xlane.xlu0 %1118
    %v1120 = vsel %vm551, %v786, 0.0
    %1121 = vadd.xlane.f32.xlu0 %v1120
    %v1122 = vpop.xlane.xlu0 %1121
    %v1123 = vsel %vm551, %v787, 0.0
    %1124 = vadd.xlane.f32.xlu0 %v1123
    %v1125 = vpop.xlane.xlu0 %1124
    %v1126 = vsel %vm551, %v788, 0.0
    %1127 = vadd.xlane.f32.xlu0 %v1126
    %v1128 = vpop.xlane.xlu0 %1127
    %v1129 = vsel %vm551, %v789, 0.0
    %1130 = vadd.xlane.f32.xlu0 %v1129
    %v1131 = vpop.xlane.xlu0 %1130
    %v1132 = vsel %vm551, %v790, 0.0
    %1133 = vadd.xlane.f32.xlu0 %v1132
    %v1134 = vpop.xlane.xlu0 %1133
    %v1135 = vsel %vm551, %v791, 0.0
    %1136 = vadd.xlane.f32.xlu0 %v1135
    %v1137 = vpop.xlane.xlu0 %1136
    %v1138 = vsel %vm551, %v792, 0.0
    %1139 = vadd.xlane.f32.xlu0 %v1138
    %v1140 = vpop.xlane.xlu0 %1139
    %v1141 = vsel %vm551, %v793, 0.0
    %1142 = vadd.xlane.f32.xlu0 %v1141
    %v1143 = vpop.xlane.xlu0 %1142
    %v1144 = vsel %vm551, %v794, 0.0
    %1145 = vadd.xlane.f32.xlu0 %v1144
    %v1146 = vpop.xlane.xlu0 %1145
    %v1147 = vsel %vm551, %v795, 0.0
    %1148 = vadd.xlane.f32.xlu0 %v1147
    %v1149 = vpop.xlane.xlu0 %1148
    %v1150 = vsel %vm551, %v796, 0.0
    %1151 = vadd.xlane.f32.xlu0 %v1150
    %v1152 = vpop.xlane.xlu0 %1151
    %v1153 = vsel %vm551, %v797, 0.0
    %1154 = vadd.xlane.f32.xlu0 %v1153
    %v1155 = vpop.xlane.xlu0 %1154
    %v1156 = vsel %vm551, %v798, 0.0
    %1157 = vadd.xlane.f32.xlu0 %v1156
    %v1158 = vpop.xlane.xlu0 %1157
    %v1159 = vsel %vm551, %v799, 0.0
    %1160 = vadd.xlane.f32.xlu0 %v1159
    %v1161 = vpop.xlane.xlu0 %1160
    %v1162 = vsel %vm551, %v800, 0.0
    %1163 = vadd.xlane.f32.xlu0 %v1162
    %v1164 = vpop.xlane.xlu0 %1163
    %v1165 = vsel %vm551, %v801, 0.0
    %1166 = vadd.xlane.f32.xlu0 %v1165
    %v1167 = vpop.xlane.xlu0 %1166
    %v1168 = vsel %vm551, %v802, 0.0
    %1169 = vadd.xlane.f32.xlu0 %v1168
    %v1170 = vpop.xlane.xlu0 %1169
    %v1171 = vsel %vm551, %v803, 0.0
    %1172 = vadd.xlane.f32.xlu0 %v1171
    %v1173 = vpop.xlane.xlu0 %1172
    %v1174 = vsel %vm551, %v804, 0.0
    %1175 = vadd.xlane.f32.xlu0 %v1174
    %v1176 = vpop.xlane.xlu0 %1175
    %v1177 = vsel %vm551, %v805, 0.0
    %1178 = vadd.xlane.f32.xlu0 %v1177
    %v1179 = vpop.xlane.xlu0 %1178
    %v1180 = vsel %vm551, %v806, 0.0
    %1181 = vadd.xlane.f32.xlu0 %v1180
    %v1182 = vpop.xlane.xlu0 %1181
    %v1183 = vsel %vm551, %v807, 0.0
    %1184 = vadd.xlane.f32.xlu0 %v1183
    %v1185 = vpop.xlane.xlu0 %1184
    %v1186 = vsel %vm551, %v808, 0.0
    %1187 = vadd.xlane.f32.xlu0 %v1186
    %v1188 = vpop.xlane.xlu0 %1187
    %v1189 = vsel %vm551, %v809, 0.0
    %1190 = vadd.xlane.f32.xlu0 %v1189
    %v1191 = vpop.xlane.xlu0 %1190
    %v1192 = vsel %vm551, %v810, 0.0
    %1193 = vadd.xlane.f32.xlu0 %v1192
    %v1194 = vpop.xlane.xlu0 %1193
    %v1195 = vmul.f32 %v813, 0.0625
    %v1196 = vmul.f32 %v816, 0.0625
    %v1197 = vmul.f32 %v819, 0.0625
    %v1198 = vmul.f32 %v822, 0.0625
    %v1199 = vmul.f32 %v825, 0.0625
    %v1200 = vmul.f32 %v828, 0.0625
    %v1201 = vmul.f32 %v831, 0.0625
    %v1202 = vmul.f32 %v834, 0.0625
    %v1203 = vmul.f32 %v837, 0.0625
    %v1204 = vmul.f32 %v840, 0.0625
    %v1205 = vmul.f32 %v843, 0.0625
    %v1206 = vmul.f32 %v846, 0.0625
    %v1207 = vmul.f32 %v849, 0.0625
    %v1208 = vmul.f32 %v852, 0.0625
    %v1209 = vmul.f32 %v855, 0.0625
    %v1210 = vmul.f32 %v858, 0.0625
    %v1211 = vmul.f32 %v861, 0.0625
    %v1212 = vmul.f32 %v864, 0.0625
    %v1213 = vmul.f32 %v867, 0.0625
    %v1214 = vmul.f32 %v870, 0.0625
    %v1215 = vmul.f32 %v873, 0.0625
    %v1216 = vmul.f32 %v876, 0.0625
    %v1217 = vmul.f32 %v879, 0.0625
    %v1218 = vmul.f32 %v882, 0.0625
    %v1219 = vmul.f32 %v885, 0.0625
    %v1220 = vmul.f32 %v888, 0.0625
    %v1221 = vmul.f32 %v891, 0.0625
    %v1222 = vmul.f32 %v894, 0.0625
    %v1223 = vmul.f32 %v897, 0.0625
    %v1224 = vmul.f32 %v900, 0.0625
    %v1225 = vmul.f32 %v903, 0.0625
    %v1226 = vmul.f32 %v906, 0.0625
    %v1227 = vmul.f32 %v909, 0.0625
    %v1228 = vmul.f32 %v912, 0.0625
    %v1229 = vmul.f32 %v915, 0.0625
    %v1230 = vmul.f32 %v918, 0.0625
    %v1231 = vmul.f32 %v921, 0.0625
    %v1232 = vmul.f32 %v924, 0.0625
    %v1233 = vmul.f32 %v927, 0.0625
    %v1234 = vmul.f32 %v930, 0.0625
    %v1235 = vmul.f32 %v933, 0.0625
    %v1236 = vmul.f32 %v936, 0.0625
    %v1237 = vmul.f32 %v939, 0.0625
    %v1238 = vmul.f32 %v942, 0.0625
    %v1239 = vmul.f32 %v945, 0.0625
    %v1240 = vmul.f32 %v948, 0.0625
    %v1241 = vmul.f32 %v951, 0.0625
    %v1242 = vmul.f32 %v954, 0.0625
    %v1243 = vmul.f32 %v957, 0.0625
    %v1244 = vmul.f32 %v960, 0.0625
    %v1245 = vmul.f32 %v963, 0.0625
    %v1246 = vmul.f32 %v966, 0.0625
    %v1247 = vmul.f32 %v969, 0.0625
    %v1248 = vmul.f32 %v972, 0.0625
    %v1249 = vmul.f32 %v975, 0.0625
    %v1250 = vmul.f32 %v978, 0.0625
    %v1251 = vmul.f32 %v981, 0.0625
    %v1252 = vmul.f32 %v984, 0.0625
    %v1253 = vmul.f32 %v987, 0.0625
    %v1254 = vmul.f32 %v990, 0.0625
    %v1255 = vmul.f32 %v993, 0.0625
    %v1256 = vmul.f32 %v996, 0.0625
    %v1257 = vmul.f32 %v999, 0.0625
    %v1258 = vmul.f32 %v1002, 0.0625
    %v1259 = vmul.f32 %v1005, 0.0625
    %v1260 = vmul.f32 %v1008, 0.0625
    %v1261 = vmul.f32 %v1011, 0.0625
    %v1262 = vmul.f32 %v1014, 0.0625
    %v1263 = vmul.f32 %v1017, 0.0625
    %v1264 = vmul.f32 %v1020, 0.0625
    %v1265 = vmul.f32 %v1023, 0.0625
    %v1266 = vmul.f32 %v1026, 0.0625
    %v1267 = vmul.f32 %v1029, 0.0625
    %v1268 = vmul.f32 %v1032, 0.0625
    %v1269 = vmul.f32 %v1035, 0.0625
    %v1270 = vmul.f32 %v1038, 0.0625
    %v1271 = vmul.f32 %v1041, 0.0625
    %v1272 = vmul.f32 %v1044, 0.0625
    %v1273 = vmul.f32 %v1047, 0.0625
    %v1274 = vmul.f32 %v1050, 0.0625
    %v1275 = vmul.f32 %v1053, 0.0625
    %v1276 = vmul.f32 %v1056, 0.0625
    %v1277 = vmul.f32 %v1059, 0.0625
    %v1278 = vmul.f32 %v1062, 0.0625
    %v1279 = vmul.f32 %v1065, 0.0625
    %v1280 = vmul.f32 %v1068, 0.0625
    %v1281 = vmul.f32 %v1071, 0.0625
    %v1282 = vmul.f32 %v1074, 0.0625
    %v1283 = vmul.f32 %v1077, 0.0625
    %v1284 = vmul.f32 %v1080, 0.0625
    %v1285 = vmul.f32 %v1083, 0.0625
    %v1286 = vmul.f32 %v1086, 0.0625
    %v1287 = vmul.f32 %v1089, 0.0625
    %v1288 = vmul.f32 %v1092, 0.0625
    %v1289 = vmul.f32 %v1095, 0.0625
    %v1290 = vmul.f32 %v1098, 0.0625
    %v1291 = vmul.f32 %v1101, 0.0625
    %v1292 = vmul.f32 %v1104, 0.0625
    %v1293 = vmul.f32 %v1107, 0.0625
    %v1294 = vmul.f32 %v1110, 0.0625
    %v1295 = vmul.f32 %v1113, 0.0625
    %v1296 = vmul.f32 %v1116, 0.0625
    %v1297 = vmul.f32 %v1119, 0.0625
    %v1298 = vmul.f32 %v1122, 0.0625
    %v1299 = vmul.f32 %v1125, 0.0625
    %v1300 = vmul.f32 %v1128, 0.0625
    %v1301 = vmul.f32 %v1131, 0.0625
    %v1302 = vmul.f32 %v1134, 0.0625
    %v1303 = vmul.f32 %v1137, 0.0625
    %v1304 = vmul.f32 %v1140, 0.0625
    %v1305 = vmul.f32 %v1143, 0.0625
    %v1306 = vmul.f32 %v1146, 0.0625
    %v1307 = vmul.f32 %v1149, 0.0625
    %v1308 = vmul.f32 %v1152, 0.0625
    %v1309 = vmul.f32 %v1155, 0.0625
    %v1310 = vmul.f32 %v1158, 0.0625
    %v1311 = vmul.f32 %v1161, 0.0625
    %v1312 = vmul.f32 %v1164, 0.0625
    %v1313 = vmul.f32 %v1167, 0.0625
    %v1314 = vmul.f32 %v1170, 0.0625
    %v1315 = vmul.f32 %v1173, 0.0625
    %v1316 = vmul.f32 %v1176, 0.0625
    %v1317 = vmul.f32 %v1179, 0.0625
    %v1318 = vmul.f32 %v1182, 0.0625
    %v1319 = vmul.f32 %v1185, 0.0625
    %v1320 = vmul.f32 %v1188, 0.0625
    %v1321 = vmul.f32 %v1191, 0.0625
    %v1322 = vmul.f32 %v1194, 0.0625
    %v1323 = vld [vmem:[%s1] sm:$0xff]
    %v1324 = vld [vmem:[%s1 + $0x8] sm:$0xff]
    %v1325 = vld [vmem:[%s1 + $0x10] sm:$0xff]
    %v1326 = vld [vmem:[%s1 + $0x18] sm:$0xff]
    %v1327 = vld [vmem:[%s1 + $0x20] sm:$0xff]
    %v1328 = vld [vmem:[%s1 + $0x28] sm:$0xff]
    %v1329 = vld [vmem:[%s1 + $0x30] sm:$0xff]
    %v1330 = vld [vmem:[%s1 + $0x38] sm:$0xff]
    %v1331 = vld [vmem:[%s1 + $0x40] sm:$0xff]
    %v1332 = vld [vmem:[%s1 + $0x48] sm:$0xff]
    %v1333 = vld [vmem:[%s1 + $0x50] sm:$0xff]
    %v1334 = vld [vmem:[%s1 + $0x58] sm:$0xff]
    %v1335 = vld [vmem:[%s1 + $0x60] sm:$0xff]
    %v1336 = vld [vmem:[%s1 + $0x68] sm:$0xff]
    %v1337 = vld [vmem:[%s1 + $0x70] sm:$0xff]
    %v1338 = vld [vmem:[%s1 + $0x78] sm:$0xff]
    %v1339 = vld [vmem:[%s1 + $0x80] sm:$0xff]
    %v1340 = vld [vmem:[%s1 + $0x88] sm:$0xff]
    %v1341 = vld [vmem:[%s1 + $0x90] sm:$0xff]
    %v1342 = vld [vmem:[%s1 + $0x98] sm:$0xff]
    %v1343 = vld [vmem:[%s1 + $0xa0] sm:$0xff]
    %v1344 = vld [vmem:[%s1 + $0xa8] sm:$0xff]
    %v1345 = vld [vmem:[%s1 + $0xb0] sm:$0xff]
    %v1346 = vld [vmem:[%s1 + $0xb8] sm:$0xff]
    %v1347 = vld [vmem:[%s1 + $0xc0] sm:$0xff]
    %v1348 = vld [vmem:[%s1 + $0xc8] sm:$0xff]
    %v1349 = vld [vmem:[%s1 + $0xd0] sm:$0xff]
    %v1350 = vld [vmem:[%s1 + $0xd8] sm:$0xff]
    %v1351 = vld [vmem:[%s1 + $0xe0] sm:$0xff]
    %v1352 = vld [vmem:[%s1 + $0xe8] sm:$0xff]
    %v1353 = vld [vmem:[%s1 + $0xf0] sm:$0xff]
    %v1354 = vld [vmem:[%s1 + $0xf8] sm:$0xff]
    %v1355 = vld [vmem:[%s1 + $0x100] sm:$0xff]
    %v1356 = vld [vmem:[%s1 + $0x108] sm:$0xff]
    %v1357 = vld [vmem:[%s1 + $0x110] sm:$0xff]
    %v1358 = vld [vmem:[%s1 + $0x118] sm:$0xff]
    %v1359 = vld [vmem:[%s1 + $0x120] sm:$0xff]
    %v1360 = vld [vmem:[%s1 + $0x128] sm:$0xff]
    %v1361 = vld [vmem:[%s1 + $0x130] sm:$0xff]
    %v1362 = vld [vmem:[%s1 + $0x138] sm:$0xff]
    %v1363 = vld [vmem:[%s1 + $0x140] sm:$0xff]
    %v1364 = vld [vmem:[%s1 + $0x148] sm:$0xff]
    %v1365 = vld [vmem:[%s1 + $0x150] sm:$0xff]
    %v1366 = vld [vmem:[%s1 + $0x158] sm:$0xff]
    %v1367 = vld [vmem:[%s1 + $0x160] sm:$0xff]
    %v1368 = vld [vmem:[%s1 + $0x168] sm:$0xff]
    %v1369 = vld [vmem:[%s1 + $0x170] sm:$0xff]
    %v1370 = vld [vmem:[%s1 + $0x178] sm:$0xff]
    %v1371 = vld [vmem:[%s1 + $0x180] sm:$0xff]
    %v1372 = vld [vmem:[%s1 + $0x188] sm:$0xff]
    %v1373 = vld [vmem:[%s1 + $0x190] sm:$0xff]
    %v1374 = vld [vmem:[%s1 + $0x198] sm:$0xff]
    %v1375 = vld [vmem:[%s1 + $0x1a0] sm:$0xff]
    %v1376 = vld [vmem:[%s1 + $0x1a8] sm:$0xff]
    %v1377 = vld [vmem:[%s1 + $0x1b0] sm:$0xff]
    %v1378 = vld [vmem:[%s1 + $0x1b8] sm:$0xff]
    %v1379 = vld [vmem:[%s1 + $0x1c0] sm:$0xff]
    %v1380 = vld [vmem:[%s1 + $0x1c8] sm:$0xff]
    %v1381 = vld [vmem:[%s1 + $0x1d0] sm:$0xff]
    %v1382 = vld [vmem:[%s1 + $0x1d8] sm:$0xff]
    %v1383 = vld [vmem:[%s1 + $0x1e0] sm:$0xff]
    %v1384 = vld [vmem:[%s1 + $0x1e8] sm:$0xff]
    %v1385 = vld [vmem:[%s1 + $0x1f0] sm:$0xff]
    %v1386 = vld [vmem:[%s1 + $0x1f8] sm:$0xff]
    %v1387 = vld [vmem:[%s1 + $0x200] sm:$0xff]
    %v1388 = vld [vmem:[%s1 + $0x208] sm:$0xff]
    %v1389 = vld [vmem:[%s1 + $0x210] sm:$0xff]
    %v1390 = vld [vmem:[%s1 + $0x218] sm:$0xff]
    %v1391 = vld [vmem:[%s1 + $0x220] sm:$0xff]
    %v1392 = vld [vmem:[%s1 + $0x228] sm:$0xff]
    %v1393 = vld [vmem:[%s1 + $0x230] sm:$0xff]
    %v1394 = vld [vmem:[%s1 + $0x238] sm:$0xff]
    %v1395 = vld [vmem:[%s1 + $0x240] sm:$0xff]
    %v1396 = vld [vmem:[%s1 + $0x248] sm:$0xff]
    %v1397 = vld [vmem:[%s1 + $0x250] sm:$0xff]
    %v1398 = vld [vmem:[%s1 + $0x258] sm:$0xff]
    %v1399 = vld [vmem:[%s1 + $0x260] sm:$0xff]
    %v1400 = vld [vmem:[%s1 + $0x268] sm:$0xff]
    %v1401 = vld [vmem:[%s1 + $0x270] sm:$0xff]
    %v1402 = vld [vmem:[%s1 + $0x278] sm:$0xff]
    %v1403 = vld [vmem:[%s1 + $0x280] sm:$0xff]
    %v1404 = vld [vmem:[%s1 + $0x288] sm:$0xff]
    %v1405 = vld [vmem:[%s1 + $0x290] sm:$0xff]
    %v1406 = vld [vmem:[%s1 + $0x298] sm:$0xff]
    %v1407 = vld [vmem:[%s1 + $0x2a0] sm:$0xff]
    %v1408 = vld [vmem:[%s1 + $0x2a8] sm:$0xff]
    %v1409 = vld [vmem:[%s1 + $0x2b0] sm:$0xff]
    %v1410 = vld [vmem:[%s1 + $0x2b8] sm:$0xff]
    %v1411 = vld [vmem:[%s1 + $0x2c0] sm:$0xff]
    %v1412 = vld [vmem:[%s1 + $0x2c8] sm:$0xff]
    %v1413 = vld [vmem:[%s1 + $0x2d0] sm:$0xff]
    %v1414 = vld [vmem:[%s1 + $0x2d8] sm:$0xff]
    %v1415 = vld [vmem:[%s1 + $0x2e0] sm:$0xff]
    %v1416 = vld [vmem:[%s1 + $0x2e8] sm:$0xff]
    %v1417 = vld [vmem:[%s1 + $0x2f0] sm:$0xff]
    %v1418 = vld [vmem:[%s1 + $0x2f8] sm:$0xff]
    %v1419 = vld [vmem:[%s1 + $0x300] sm:$0xff]
    %v1420 = vld [vmem:[%s1 + $0x308] sm:$0xff]
    %v1421 = vld [vmem:[%s1 + $0x310] sm:$0xff]
    %v1422 = vld [vmem:[%s1 + $0x318] sm:$0xff]
    %v1423 = vld [vmem:[%s1 + $0x320] sm:$0xff]
    %v1424 = vld [vmem:[%s1 + $0x328] sm:$0xff]
    %v1425 = vld [vmem:[%s1 + $0x330] sm:$0xff]
    %v1426 = vld [vmem:[%s1 + $0x338] sm:$0xff]
    %v1427 = vld [vmem:[%s1 + $0x340] sm:$0xff]
    %v1428 = vld [vmem:[%s1 + $0x348] sm:$0xff]
    %v1429 = vld [vmem:[%s1 + $0x350] sm:$0xff]
    %v1430 = vld [vmem:[%s1 + $0x358] sm:$0xff]
    %v1431 = vld [vmem:[%s1 + $0x360] sm:$0xff]
    %v1432 = vld [vmem:[%s1 + $0x368] sm:$0xff]
    %v1433 = vld [vmem:[%s1 + $0x370] sm:$0xff]
    %v1434 = vld [vmem:[%s1 + $0x378] sm:$0xff]
    %v1435 = vld [vmem:[%s1 + $0x380] sm:$0xff]
    %v1436 = vld [vmem:[%s1 + $0x388] sm:$0xff]
    %v1437 = vld [vmem:[%s1 + $0x390] sm:$0xff]
    %v1438 = vld [vmem:[%s1 + $0x398] sm:$0xff]
    %v1439 = vld [vmem:[%s1 + $0x3a0] sm:$0xff]
    %v1440 = vld [vmem:[%s1 + $0x3a8] sm:$0xff]
    %v1441 = vld [vmem:[%s1 + $0x3b0] sm:$0xff]
    %v1442 = vld [vmem:[%s1 + $0x3b8] sm:$0xff]
    %v1443 = vld [vmem:[%s1 + $0x3c0] sm:$0xff]
    %v1444 = vld [vmem:[%s1 + $0x3c8] sm:$0xff]
    %v1445 = vld [vmem:[%s1 + $0x3d0] sm:$0xff]
    %v1446 = vld [vmem:[%s1 + $0x3d8] sm:$0xff]
    %v1447 = vld [vmem:[%s1 + $0x3e0] sm:$0xff]
    %v1448 = vld [vmem:[%s1 + $0x3e8] sm:$0xff]
    %v1449 = vld [vmem:[%s1 + $0x3f0] sm:$0xff]
    %v1450 = vld [vmem:[%s1 + $0x3f8] sm:$0xff]
    %v1451 = vld [vmem:[%s2] sm:$0x3]
    %v1453 = vlaneseq
    %v1454 = vshrl.u32 %v1453, 7
    %v1455 = vsub.s32 0, %v1454
    %v1456 = vrot.slane %v1451, %v1455
    %v1457 = vlaneseq
    %v1458 = vshrl.u32 %v1457, 7
    %v1459 = vsub.s32 1, %v1458
    %v1460 = vrot.slane %v1451, %v1459
    %v1591 = vlaneseq
    %v1592 = vand.u32 %v1591, 127
    %v1593 = vlaneseq
    %v1594 = vshrl.u32 %v1593, 7
    %v1595 = vsub.s32 %v1592, %v1594
    %v1596 = vrot.slane %v1195, %v1595
    %v1597 = vadd.s32 %v1592, 4294967288
    %v1598 = vlaneseq
    %v1599 = vshrl.u32 %v1598, 7
    %v1600 = vsub.s32 %v1597, %v1599
    %v1601 = vrot.slane %v1196, %v1600
    %vm1602 = vcmask 130112
    %v1603 = vsel %vm1602, %v1601, %v1596
    %v1604 = vadd.s32 %v1592, 4294967280
    %v1605 = vlaneseq
    %v1606 = vshrl.u32 %v1605, 7
    %v1607 = vsub.s32 %v1604, %v1606
    %v1608 = vrot.slane %v1197, %v1607
    %vm1609 = vcmask 195712
    %v1610 = vsel %vm1609, %v1608, %v1603
    %v1611 = vadd.s32 %v1592, 4294967272
    %v1612 = vlaneseq
    %v1613 = vshrl.u32 %v1612, 7
    %v1614 = vsub.s32 %v1611, %v1613
    %v1615 = vrot.slane %v1198, %v1614
    %vm1616 = vcmask 261312
    %v1617 = vsel %vm1616, %v1615, %v1610
    %v1618 = vadd.s32 %v1592, 4294967264
    %v1619 = vlaneseq
    %v1620 = vshrl.u32 %v1619, 7
    %v1621 = vsub.s32 %v1618, %v1620
    %v1622 = vrot.slane %v1199, %v1621
    %vm1623 = vcmask 326912
    %v1624 = vsel %vm1623, %v1622, %v1617
    %v1625 = vadd.s32 %v1592, 4294967256
    %v1626 = vlaneseq
    %v1627 = vshrl.u32 %v1626, 7
    %v1628 = vsub.s32 %v1625, %v1627
    %v1629 = vrot.slane %v1200, %v1628
    %vm1630 = vcmask 392512
    %v1631 = vsel %vm1630, %v1629, %v1624
    %v1632 = vadd.s32 %v1592, 4294967248
    %v1633 = vlaneseq
    %v1634 = vshrl.u32 %v1633, 7
    %v1635 = vsub.s32 %v1632, %v1634
    %v1636 = vrot.slane %v1201, %v1635
    %vm1637 = vcmask 458112
    %v1638 = vsel %vm1637, %v1636, %v1631
    %v1639 = vadd.s32 %v1592, 4294967240
    %v1640 = vlaneseq
    %v1641 = vshrl.u32 %v1640, 7
    %v1642 = vsub.s32 %v1639, %v1641
    %v1643 = vrot.slane %v1202, %v1642
    %vm1644 = vcmask 523712
    %v1645 = vsel %vm1644, %v1643, %v1638
    %v1646 = vadd.s32 %v1592, 4294967232
    %v1647 = vlaneseq
    %v1648 = vshrl.u32 %v1647, 7
    %v1649 = vsub.s32 %v1646, %v1648
    %v1650 = vrot.slane %v1203, %v1649
    %vm1651 = vcmask 589312
    %v1652 = vsel %vm1651, %v1650, %v1645
    %v1653 = vadd.s32 %v1592, 4294967224
    %v1654 = vlaneseq
    %v1655 = vshrl.u32 %v1654, 7
    %v1656 = vsub.s32 %v1653, %v1655
    %v1657 = vrot.slane %v1204, %v1656
    %vm1658 = vcmask 654912
    %v1659 = vsel %vm1658, %v1657, %v1652
    %v1660 = vadd.s32 %v1592, 4294967216
    %v1661 = vlaneseq
    %v1662 = vshrl.u32 %v1661, 7
    %v1663 = vsub.s32 %v1660, %v1662
    %v1664 = vrot.slane %v1205, %v1663
    %vm1665 = vcmask 720512
    %v1666 = vsel %vm1665, %v1664, %v1659
    %v1667 = vadd.s32 %v1592, 4294967208
    %v1668 = vlaneseq
    %v1669 = vshrl.u32 %v1668, 7
    %v1670 = vsub.s32 %v1667, %v1669
    %v1671 = vrot.slane %v1206, %v1670
    %vm1672 = vcmask 786112
    %v1673 = vsel %vm1672, %v1671, %v1666
    %v1674 = vadd.s32 %v1592, 4294967200
    %v1675 = vlaneseq
    %v1676 = vshrl.u32 %v1675, 7
    %v1677 = vsub.s32 %v1674, %v1676
    %v1678 = vrot.slane %v1207, %v1677
    %vm1679 = vcmask 851712
    %v1680 = vsel %vm1679, %v1678, %v1673
    %v1681 = vadd.s32 %v1592, 4294967192
    %v1682 = vlaneseq
    %v1683 = vshrl.u32 %v1682, 7
    %v1684 = vsub.s32 %v1681, %v1683
    %v1685 = vrot.slane %v1208, %v1684
    %vm1686 = vcmask 917312
    %v1687 = vsel %vm1686, %v1685, %v1680
    %v1688 = vadd.s32 %v1592, 4294967184
    %v1689 = vlaneseq
    %v1690 = vshrl.u32 %v1689, 7
    %v1691 = vsub.s32 %v1688, %v1690
    %v1692 = vrot.slane %v1209, %v1691
    %vm1693 = vcmask 982912
    %v1694 = vsel %vm1693, %v1692, %v1687
    %v1695 = vadd.s32 %v1592, 4294967176
    %v1696 = vlaneseq
    %v1697 = vshrl.u32 %v1696, 7
    %v1698 = vsub.s32 %v1695, %v1697
    %v1699 = vrot.slane %v1210, %v1698
    %vm1700 = vcmask 1048512
    %v1701 = vsel %vm1700, %v1699, %v1694
    %v1702 = vlaneseq
    %v1703 = vshrl.u32 %v1702, 7
    %v1704 = vsub.s32 %v1592, %v1703
    %v1705 = vrot.slane %v1211, %v1704
    %v1706 = vlaneseq
    %v1707 = vshrl.u32 %v1706, 7
    %v1708 = vsub.s32 %v1597, %v1707
    %v1709 = vrot.slane %v1212, %v1708
    %v1710 = vsel %vm1602, %v1709, %v1705
    %v1711 = vlaneseq
    %v1712 = vshrl.u32 %v1711, 7
    %v1713 = vsub.s32 %v1604, %v1712
    %v1714 = vrot.slane %v1213, %v1713
    %v1715 = vsel %vm1609, %v1714, %v1710
    %v1716 = vlaneseq
    %v1717 = vshrl.u32 %v1716, 7
    %v1718 = vsub.s32 %v1611, %v1717
    %v1719 = vrot.slane %v1214, %v1718
    %v1720 = vsel %vm1616, %v1719, %v1715
    %v1721 = vlaneseq
    %v1722 = vshrl.u32 %v1721, 7
    %v1723 = vsub.s32 %v1618, %v1722
    %v1724 = vrot.slane %v1215, %v1723
    %v1725 = vsel %vm1623, %v1724, %v1720
    %v1726 = vlaneseq
    %v1727 = vshrl.u32 %v1726, 7
    %v1728 = vsub.s32 %v1625, %v1727
    %v1729 = vrot.slane %v1216, %v1728
    %v1730 = vsel %vm1630, %v1729, %v1725
    %v1731 = vlaneseq
    %v1732 = vshrl.u32 %v1731, 7
    %v1733 = vsub.s32 %v1632, %v1732
    %v1734 = vrot.slane %v1217, %v1733
    %v1735 = vsel %vm1637, %v1734, %v1730
    %v1736 = vlaneseq
    %v1737 = vshrl.u32 %v1736, 7
    %v1738 = vsub.s32 %v1639, %v1737
    %v1739 = vrot.slane %v1218, %v1738
    %v1740 = vsel %vm1644, %v1739, %v1735
    %v1741 = vlaneseq
    %v1742 = vshrl.u32 %v1741, 7
    %v1743 = vsub.s32 %v1646, %v1742
    %v1744 = vrot.slane %v1219, %v1743
    %v1745 = vsel %vm1651, %v1744, %v1740
    %v1746 = vlaneseq
    %v1747 = vshrl.u32 %v1746, 7
    %v1748 = vsub.s32 %v1653, %v1747
    %v1749 = vrot.slane %v1220, %v1748
    %v1750 = vsel %vm1658, %v1749, %v1745
    %v1751 = vlaneseq
    %v1752 = vshrl.u32 %v1751, 7
    %v1753 = vsub.s32 %v1660, %v1752
    %v1754 = vrot.slane %v1221, %v1753
    %v1755 = vsel %vm1665, %v1754, %v1750
    %v1756 = vlaneseq
    %v1757 = vshrl.u32 %v1756, 7
    %v1758 = vsub.s32 %v1667, %v1757
    %v1759 = vrot.slane %v1222, %v1758
    %v1760 = vsel %vm1672, %v1759, %v1755
    %v1761 = vlaneseq
    %v1762 = vshrl.u32 %v1761, 7
    %v1763 = vsub.s32 %v1674, %v1762
    %v1764 = vrot.slane %v1223, %v1763
    %v1765 = vsel %vm1679, %v1764, %v1760
    %v1766 = vlaneseq
    %v1767 = vshrl.u32 %v1766, 7
    %v1768 = vsub.s32 %v1681, %v1767
    %v1769 = vrot.slane %v1224, %v1768
    %v1770 = vsel %vm1686, %v1769, %v1765
    %v1771 = vlaneseq
    %v1772 = vshrl.u32 %v1771, 7
    %v1773 = vsub.s32 %v1688, %v1772
    %v1774 = vrot.slane %v1225, %v1773
    %v1775 = vsel %vm1693, %v1774, %v1770
    %v1776 = vlaneseq
    %v1777 = vshrl.u32 %v1776, 7
    %v1778 = vsub.s32 %v1695, %v1777
    %v1779 = vrot.slane %v1226, %v1778
    %v1780 = vsel %vm1700, %v1779, %v1775
    %v1781 = vlaneseq
    %v1782 = vshrl.u32 %v1781, 7
    %v1783 = vsub.s32 %v1592, %v1782
    %v1784 = vrot.slane %v1227, %v1783
    %v1785 = vlaneseq
    %v1786 = vshrl.u32 %v1785, 7
    %v1787 = vsub.s32 %v1597, %v1786
    %v1788 = vrot.slane %v1228, %v1787
    %v1789 = vsel %vm1602, %v1788, %v1784
    %v1790 = vlaneseq
    %v1791 = vshrl.u32 %v1790, 7
    %v1792 = vsub.s32 %v1604, %v1791
    %v1793 = vrot.slane %v1229, %v1792
    %v1794 = vsel %vm1609, %v1793, %v1789
    %v1795 = vlaneseq
    %v1796 = vshrl.u32 %v1795, 7
    %v1797 = vsub.s32 %v1611, %v1796
    %v1798 = vrot.slane %v1230, %v1797
    %v1799 = vsel %vm1616, %v1798, %v1794
    %v1800 = vlaneseq
    %v1801 = vshrl.u32 %v1800, 7
    %v1802 = vsub.s32 %v1618, %v1801
    %v1803 = vrot.slane %v1231, %v1802
    %v1804 = vsel %vm1623, %v1803, %v1799
    %v1805 = vlaneseq
    %v1806 = vshrl.u32 %v1805, 7
    %v1807 = vsub.s32 %v1625, %v1806
    %v1808 = vrot.slane %v1232, %v1807
    %v1809 = vsel %vm1630, %v1808, %v1804
    %v1810 = vlaneseq
    %v1811 = vshrl.u32 %v1810, 7
    %v1812 = vsub.s32 %v1632, %v1811
    %v1813 = vrot.slane %v1233, %v1812
    %v1814 = vsel %vm1637, %v1813, %v1809
    %v1815 = vlaneseq
    %v1816 = vshrl.u32 %v1815, 7
    %v1817 = vsub.s32 %v1639, %v1816
    %v1818 = vrot.slane %v1234, %v1817
    %v1819 = vsel %vm1644, %v1818, %v1814
    %v1820 = vlaneseq
    %v1821 = vshrl.u32 %v1820, 7
    %v1822 = vsub.s32 %v1646, %v1821
    %v1823 = vrot.slane %v1235, %v1822
    %v1824 = vsel %vm1651, %v1823, %v1819
    %v1825 = vlaneseq
    %v1826 = vshrl.u32 %v1825, 7
    %v1827 = vsub.s32 %v1653, %v1826
    %v1828 = vrot.slane %v1236, %v1827
    %v1829 = vsel %vm1658, %v1828, %v1824
    %v1830 = vlaneseq
    %v1831 = vshrl.u32 %v1830, 7
    %v1832 = vsub.s32 %v1660, %v1831
    %v1833 = vrot.slane %v1237, %v1832
    %v1834 = vsel %vm1665, %v1833, %v1829
    %v1835 = vlaneseq
    %v1836 = vshrl.u32 %v1835, 7
    %v1837 = vsub.s32 %v1667, %v1836
    %v1838 = vrot.slane %v1238, %v1837
    %v1839 = vsel %vm1672, %v1838, %v1834
    %v1840 = vlaneseq
    %v1841 = vshrl.u32 %v1840, 7
    %v1842 = vsub.s32 %v1674, %v1841
    %v1843 = vrot.slane %v1239, %v1842
    %v1844 = vsel %vm1679, %v1843, %v1839
    %v1845 = vlaneseq
    %v1846 = vshrl.u32 %v1845, 7
    %v1847 = vsub.s32 %v1681, %v1846
    %v1848 = vrot.slane %v1240, %v1847
    %v1849 = vsel %vm1686, %v1848, %v1844
    %v1850 = vlaneseq
    %v1851 = vshrl.u32 %v1850, 7
    %v1852 = vsub.s32 %v1688, %v1851
    %v1853 = vrot.slane %v1241, %v1852
    %v1854 = vsel %vm1693, %v1853, %v1849
    %v1855 = vlaneseq
    %v1856 = vshrl.u32 %v1855, 7
    %v1857 = vsub.s32 %v1695, %v1856
    %v1858 = vrot.slane %v1242, %v1857
    %v1859 = vsel %vm1700, %v1858, %v1854
    %v1860 = vlaneseq
    %v1861 = vshrl.u32 %v1860, 7
    %v1862 = vsub.s32 %v1592, %v1861
    %v1863 = vrot.slane %v1243, %v1862
    %v1864 = vlaneseq
    %v1865 = vshrl.u32 %v1864, 7
    %v1866 = vsub.s32 %v1597, %v1865
    %v1867 = vrot.slane %v1244, %v1866
    %v1868 = vsel %vm1602, %v1867, %v1863
    %v1869 = vlaneseq
    %v1870 = vshrl.u32 %v1869, 7
    %v1871 = vsub.s32 %v1604, %v1870
    %v1872 = vrot.slane %v1245, %v1871
    %v1873 = vsel %vm1609, %v1872, %v1868
    %v1874 = vlaneseq
    %v1875 = vshrl.u32 %v1874, 7
    %v1876 = vsub.s32 %v1611, %v1875
    %v1877 = vrot.slane %v1246, %v1876
    %v1878 = vsel %vm1616, %v1877, %v1873
    %v1879 = vlaneseq
    %v1880 = vshrl.u32 %v1879, 7
    %v1881 = vsub.s32 %v1618, %v1880
    %v1882 = vrot.slane %v1247, %v1881
    %v1883 = vsel %vm1623, %v1882, %v1878
    %v1884 = vlaneseq
    %v1885 = vshrl.u32 %v1884, 7
    %v1886 = vsub.s32 %v1625, %v1885
    %v1887 = vrot.slane %v1248, %v1886
    %v1888 = vsel %vm1630, %v1887, %v1883
    %v1889 = vlaneseq
    %v1890 = vshrl.u32 %v1889, 7
    %v1891 = vsub.s32 %v1632, %v1890
    %v1892 = vrot.slane %v1249, %v1891
    %v1893 = vsel %vm1637, %v1892, %v1888
    %v1894 = vlaneseq
    %v1895 = vshrl.u32 %v1894, 7
    %v1896 = vsub.s32 %v1639, %v1895
    %v1897 = vrot.slane %v1250, %v1896
    %v1898 = vsel %vm1644, %v1897, %v1893
    %v1899 = vlaneseq
    %v1900 = vshrl.u32 %v1899, 7
    %v1901 = vsub.s32 %v1646, %v1900
    %v1902 = vrot.slane %v1251, %v1901
    %v1903 = vsel %vm1651, %v1902, %v1898
    %v1904 = vlaneseq
    %v1905 = vshrl.u32 %v1904, 7
    %v1906 = vsub.s32 %v1653, %v1905
    %v1907 = vrot.slane %v1252, %v1906
    %v1908 = vsel %vm1658, %v1907, %v1903
    %v1909 = vlaneseq
    %v1910 = vshrl.u32 %v1909, 7
    %v1911 = vsub.s32 %v1660, %v1910
    %v1912 = vrot.slane %v1253, %v1911
    %v1913 = vsel %vm1665, %v1912, %v1908
    %v1914 = vlaneseq
    %v1915 = vshrl.u32 %v1914, 7
    %v1916 = vsub.s32 %v1667, %v1915
    %v1917 = vrot.slane %v1254, %v1916
    %v1918 = vsel %vm1672, %v1917, %v1913
    %v1919 = vlaneseq
    %v1920 = vshrl.u32 %v1919, 7
    %v1921 = vsub.s32 %v1674, %v1920
    %v1922 = vrot.slane %v1255, %v1921
    %v1923 = vsel %vm1679, %v1922, %v1918
    %v1924 = vlaneseq
    %v1925 = vshrl.u32 %v1924, 7
    %v1926 = vsub.s32 %v1681, %v1925
    %v1927 = vrot.slane %v1256, %v1926
    %v1928 = vsel %vm1686, %v1927, %v1923
    %v1929 = vlaneseq
    %v1930 = vshrl.u32 %v1929, 7
    %v1931 = vsub.s32 %v1688, %v1930
    %v1932 = vrot.slane %v1257, %v1931
    %v1933 = vsel %vm1693, %v1932, %v1928
    %v1934 = vlaneseq
    %v1935 = vshrl.u32 %v1934, 7
    %v1936 = vsub.s32 %v1695, %v1935
    %v1937 = vrot.slane %v1258, %v1936
    %v1938 = vsel %vm1700, %v1937, %v1933
    %v1939 = vlaneseq
    %v1940 = vshrl.u32 %v1939, 7
    %v1941 = vsub.s32 %v1592, %v1940
    %v1942 = vrot.slane %v1259, %v1941
    %v1943 = vlaneseq
    %v1944 = vshrl.u32 %v1943, 7
    %v1945 = vsub.s32 %v1597, %v1944
    %v1946 = vrot.slane %v1260, %v1945
    %v1947 = vsel %vm1602, %v1946, %v1942
    %v1948 = vlaneseq
    %v1949 = vshrl.u32 %v1948, 7
    %v1950 = vsub.s32 %v1604, %v1949
    %v1951 = vrot.slane %v1261, %v1950
    %v1952 = vsel %vm1609, %v1951, %v1947
    %v1953 = vlaneseq
    %v1954 = vshrl.u32 %v1953, 7
    %v1955 = vsub.s32 %v1611, %v1954
    %v1956 = vrot.slane %v1262, %v1955
    %v1957 = vsel %vm1616, %v1956, %v1952
    %v1958 = vlaneseq
    %v1959 = vshrl.u32 %v1958, 7
    %v1960 = vsub.s32 %v1618, %v1959
    %v1961 = vrot.slane %v1263, %v1960
    %v1962 = vsel %vm1623, %v1961, %v1957
    %v1963 = vlaneseq
    %v1964 = vshrl.u32 %v1963, 7
    %v1965 = vsub.s32 %v1625, %v1964
    %v1966 = vrot.slane %v1264, %v1965
    %v1967 = vsel %vm1630, %v1966, %v1962
    %v1968 = vlaneseq
    %v1969 = vshrl.u32 %v1968, 7
    %v1970 = vsub.s32 %v1632, %v1969
    %v1971 = vrot.slane %v1265, %v1970
    %v1972 = vsel %vm1637, %v1971, %v1967
    %v1973 = vlaneseq
    %v1974 = vshrl.u32 %v1973, 7
    %v1975 = vsub.s32 %v1639, %v1974
    %v1976 = vrot.slane %v1266, %v1975
    %v1977 = vsel %vm1644, %v1976, %v1972
    %v1978 = vlaneseq
    %v1979 = vshrl.u32 %v1978, 7
    %v1980 = vsub.s32 %v1646, %v1979
    %v1981 = vrot.slane %v1267, %v1980
    %v1982 = vsel %vm1651, %v1981, %v1977
    %v1983 = vlaneseq
    %v1984 = vshrl.u32 %v1983, 7
    %v1985 = vsub.s32 %v1653, %v1984
    %v1986 = vrot.slane %v1268, %v1985
    %v1987 = vsel %vm1658, %v1986, %v1982
    %v1988 = vlaneseq
    %v1989 = vshrl.u32 %v1988, 7
    %v1990 = vsub.s32 %v1660, %v1989
    %v1991 = vrot.slane %v1269, %v1990
    %v1992 = vsel %vm1665, %v1991, %v1987
    %v1993 = vlaneseq
    %v1994 = vshrl.u32 %v1993, 7
    %v1995 = vsub.s32 %v1667, %v1994
    %v1996 = vrot.slane %v1270, %v1995
    %v1997 = vsel %vm1672, %v1996, %v1992
    %v1998 = vlaneseq
    %v1999 = vshrl.u32 %v1998, 7
    %v2000 = vsub.s32 %v1674, %v1999
    %v2001 = vrot.slane %v1271, %v2000
    %v2002 = vsel %vm1679, %v2001, %v1997
    %v2003 = vlaneseq
    %v2004 = vshrl.u32 %v2003, 7
    %v2005 = vsub.s32 %v1681, %v2004
    %v2006 = vrot.slane %v1272, %v2005
    %v2007 = vsel %vm1686, %v2006, %v2002
    %v2008 = vlaneseq
    %v2009 = vshrl.u32 %v2008, 7
    %v2010 = vsub.s32 %v1688, %v2009
    %v2011 = vrot.slane %v1273, %v2010
    %v2012 = vsel %vm1693, %v2011, %v2007
    %v2013 = vlaneseq
    %v2014 = vshrl.u32 %v2013, 7
    %v2015 = vsub.s32 %v1695, %v2014
    %v2016 = vrot.slane %v1274, %v2015
    %v2017 = vsel %vm1700, %v2016, %v2012
    %v2018 = vlaneseq
    %v2019 = vshrl.u32 %v2018, 7
    %v2020 = vsub.s32 %v1592, %v2019
    %v2021 = vrot.slane %v1275, %v2020
    %v2022 = vlaneseq
    %v2023 = vshrl.u32 %v2022, 7
    %v2024 = vsub.s32 %v1597, %v2023
    %v2025 = vrot.slane %v1276, %v2024
    %v2026 = vsel %vm1602, %v2025, %v2021
    %v2027 = vlaneseq
    %v2028 = vshrl.u32 %v2027, 7
    %v2029 = vsub.s32 %v1604, %v2028
    %v2030 = vrot.slane %v1277, %v2029
    %v2031 = vsel %vm1609, %v2030, %v2026
    %v2032 = vlaneseq
    %v2033 = vshrl.u32 %v2032, 7
    %v2034 = vsub.s32 %v1611, %v2033
    %v2035 = vrot.slane %v1278, %v2034
    %v2036 = vsel %vm1616, %v2035, %v2031
    %v2037 = vlaneseq
    %v2038 = vshrl.u32 %v2037, 7
    %v2039 = vsub.s32 %v1618, %v2038
    %v2040 = vrot.slane %v1279, %v2039
    %v2041 = vsel %vm1623, %v2040, %v2036
    %v2042 = vlaneseq
    %v2043 = vshrl.u32 %v2042, 7
    %v2044 = vsub.s32 %v1625, %v2043
    %v2045 = vrot.slane %v1280, %v2044
    %v2046 = vsel %vm1630, %v2045, %v2041
    %v2047 = vlaneseq
    %v2048 = vshrl.u32 %v2047, 7
    %v2049 = vsub.s32 %v1632, %v2048
    %v2050 = vrot.slane %v1281, %v2049
    %v2051 = vsel %vm1637, %v2050, %v2046
    %v2052 = vlaneseq
    %v2053 = vshrl.u32 %v2052, 7
    %v2054 = vsub.s32 %v1639, %v2053
    %v2055 = vrot.slane %v1282, %v2054
    %v2056 = vsel %vm1644, %v2055, %v2051
    %v2057 = vlaneseq
    %v2058 = vshrl.u32 %v2057, 7
    %v2059 = vsub.s32 %v1646, %v2058
    %v2060 = vrot.slane %v1283, %v2059
    %v2061 = vsel %vm1651, %v2060, %v2056
    %v2062 = vlaneseq
    %v2063 = vshrl.u32 %v2062, 7
    %v2064 = vsub.s32 %v1653, %v2063
    %v2065 = vrot.slane %v1284, %v2064
    %v2066 = vsel %vm1658, %v2065, %v2061
    %v2067 = vlaneseq
    %v2068 = vshrl.u32 %v2067, 7
    %v2069 = vsub.s32 %v1660, %v2068
    %v2070 = vrot.slane %v1285, %v2069
    %v2071 = vsel %vm1665, %v2070, %v2066
    %v2072 = vlaneseq
    %v2073 = vshrl.u32 %v2072, 7
    %v2074 = vsub.s32 %v1667, %v2073
    %v2075 = vrot.slane %v1286, %v2074
    %v2076 = vsel %vm1672, %v2075, %v2071
    %v2077 = vlaneseq
    %v2078 = vshrl.u32 %v2077, 7
    %v2079 = vsub.s32 %v1674, %v2078
    %v2080 = vrot.slane %v1287, %v2079
    %v2081 = vsel %vm1679, %v2080, %v2076
    %v2082 = vlaneseq
    %v2083 = vshrl.u32 %v2082, 7
    %v2084 = vsub.s32 %v1681, %v2083
    %v2085 = vrot.slane %v1288, %v2084
    %v2086 = vsel %vm1686, %v2085, %v2081
    %v2087 = vlaneseq
    %v2088 = vshrl.u32 %v2087, 7
    %v2089 = vsub.s32 %v1688, %v2088
    %v2090 = vrot.slane %v1289, %v2089
    %v2091 = vsel %vm1693, %v2090, %v2086
    %v2092 = vlaneseq
    %v2093 = vshrl.u32 %v2092, 7
    %v2094 = vsub.s32 %v1695, %v2093
    %v2095 = vrot.slane %v1290, %v2094
    %v2096 = vsel %vm1700, %v2095, %v2091
    %v2097 = vlaneseq
    %v2098 = vshrl.u32 %v2097, 7
    %v2099 = vsub.s32 %v1592, %v2098
    %v2100 = vrot.slane %v1291, %v2099
    %v2101 = vlaneseq
    %v2102 = vshrl.u32 %v2101, 7
    %v2103 = vsub.s32 %v1597, %v2102
    %v2104 = vrot.slane %v1292, %v2103
    %v2105 = vsel %vm1602, %v2104, %v2100
    %v2106 = vlaneseq
    %v2107 = vshrl.u32 %v2106, 7
    %v2108 = vsub.s32 %v1604, %v2107
    %v2109 = vrot.slane %v1293, %v2108
    %v2110 = vsel %vm1609, %v2109, %v2105
    %v2111 = vlaneseq
    %v2112 = vshrl.u32 %v2111, 7
    %v2113 = vsub.s32 %v1611, %v2112
    %v2114 = vrot.slane %v1294, %v2113
    %v2115 = vsel %vm1616, %v2114, %v2110
    %v2116 = vlaneseq
    %v2117 = vshrl.u32 %v2116, 7
    %v2118 = vsub.s32 %v1618, %v2117
    %v2119 = vrot.slane %v1295, %v2118
    %v2120 = vsel %vm1623, %v2119, %v2115
    %v2121 = vlaneseq
    %v2122 = vshrl.u32 %v2121, 7
    %v2123 = vsub.s32 %v1625, %v2122
    %v2124 = vrot.slane %v1296, %v2123
    %v2125 = vsel %vm1630, %v2124, %v2120
    %v2126 = vlaneseq
    %v2127 = vshrl.u32 %v2126, 7
    %v2128 = vsub.s32 %v1632, %v2127
    %v2129 = vrot.slane %v1297, %v2128
    %v2130 = vsel %vm1637, %v2129, %v2125
    %v2131 = vlaneseq
    %v2132 = vshrl.u32 %v2131, 7
    %v2133 = vsub.s32 %v1639, %v2132
    %v2134 = vrot.slane %v1298, %v2133
    %v2135 = vsel %vm1644, %v2134, %v2130
    %v2136 = vlaneseq
    %v2137 = vshrl.u32 %v2136, 7
    %v2138 = vsub.s32 %v1646, %v2137
    %v2139 = vrot.slane %v1299, %v2138
    %v2140 = vsel %vm1651, %v2139, %v2135
    %v2141 = vlaneseq
    %v2142 = vshrl.u32 %v2141, 7
    %v2143 = vsub.s32 %v1653, %v2142
    %v2144 = vrot.slane %v1300, %v2143
    %v2145 = vsel %vm1658, %v2144, %v2140
    %v2146 = vlaneseq
    %v2147 = vshrl.u32 %v2146, 7
    %v2148 = vsub.s32 %v1660, %v2147
    %v2149 = vrot.slane %v1301, %v2148
    %v2150 = vsel %vm1665, %v2149, %v2145
    %v2151 = vlaneseq
    %v2152 = vshrl.u32 %v2151, 7
    %v2153 = vsub.s32 %v1667, %v2152
    %v2154 = vrot.slane %v1302, %v2153
    %v2155 = vsel %vm1672, %v2154, %v2150
    %v2156 = vlaneseq
    %v2157 = vshrl.u32 %v2156, 7
    %v2158 = vsub.s32 %v1674, %v2157
    %v2159 = vrot.slane %v1303, %v2158
    %v2160 = vsel %vm1679, %v2159, %v2155
    %v2161 = vlaneseq
    %v2162 = vshrl.u32 %v2161, 7
    %v2163 = vsub.s32 %v1681, %v2162
    %v2164 = vrot.slane %v1304, %v2163
    %v2165 = vsel %vm1686, %v2164, %v2160
    %v2166 = vlaneseq
    %v2167 = vshrl.u32 %v2166, 7
    %v2168 = vsub.s32 %v1688, %v2167
    %v2169 = vrot.slane %v1305, %v2168
    %v2170 = vsel %vm1693, %v2169, %v2165
    %v2171 = vlaneseq
    %v2172 = vshrl.u32 %v2171, 7
    %v2173 = vsub.s32 %v1695, %v2172
    %v2174 = vrot.slane %v1306, %v2173
    %v2175 = vsel %vm1700, %v2174, %v2170
    %v2176 = vlaneseq
    %v2177 = vshrl.u32 %v2176, 7
    %v2178 = vsub.s32 %v1592, %v2177
    %v2179 = vrot.slane %v1307, %v2178
    %v2180 = vlaneseq
    %v2181 = vshrl.u32 %v2180, 7
    %v2182 = vsub.s32 %v1597, %v2181
    %v2183 = vrot.slane %v1308, %v2182
    %v2184 = vsel %vm1602, %v2183, %v2179
    %v2185 = vlaneseq
    %v2186 = vshrl.u32 %v2185, 7
    %v2187 = vsub.s32 %v1604, %v2186
    %v2188 = vrot.slane %v1309, %v2187
    %v2189 = vsel %vm1609, %v2188, %v2184
    %v2190 = vlaneseq
    %v2191 = vshrl.u32 %v2190, 7
    %v2192 = vsub.s32 %v1611, %v2191
    %v2193 = vrot.slane %v1310, %v2192
    %v2194 = vsel %vm1616, %v2193, %v2189
    %v2195 = vlaneseq
    %v2196 = vshrl.u32 %v2195, 7
    %v2197 = vsub.s32 %v1618, %v2196
    %v2198 = vrot.slane %v1311, %v2197
    %v2199 = vsel %vm1623, %v2198, %v2194
    %v2200 = vlaneseq
    %v2201 = vshrl.u32 %v2200, 7
    %v2202 = vsub.s32 %v1625, %v2201
    %v2203 = vrot.slane %v1312, %v2202
    %v2204 = vsel %vm1630, %v2203, %v2199
    %v2205 = vlaneseq
    %v2206 = vshrl.u32 %v2205, 7
    %v2207 = vsub.s32 %v1632, %v2206
    %v2208 = vrot.slane %v1313, %v2207
    %v2209 = vsel %vm1637, %v2208, %v2204
    %v2210 = vlaneseq
    %v2211 = vshrl.u32 %v2210, 7
    %v2212 = vsub.s32 %v1639, %v2211
    %v2213 = vrot.slane %v1314, %v2212
    %v2214 = vsel %vm1644, %v2213, %v2209
    %v2215 = vlaneseq
    %v2216 = vshrl.u32 %v2215, 7
    %v2217 = vsub.s32 %v1646, %v2216
    %v2218 = vrot.slane %v1315, %v2217
    %v2219 = vsel %vm1651, %v2218, %v2214
    %v2220 = vlaneseq
    %v2221 = vshrl.u32 %v2220, 7
    %v2222 = vsub.s32 %v1653, %v2221
    %v2223 = vrot.slane %v1316, %v2222
    %v2224 = vsel %vm1658, %v2223, %v2219
    %v2225 = vlaneseq
    %v2226 = vshrl.u32 %v2225, 7
    %v2227 = vsub.s32 %v1660, %v2226
    %v2228 = vrot.slane %v1317, %v2227
    %v2229 = vsel %vm1665, %v2228, %v2224
    %v2230 = vlaneseq
    %v2231 = vshrl.u32 %v2230, 7
    %v2232 = vsub.s32 %v1667, %v2231
    %v2233 = vrot.slane %v1318, %v2232
    %v2234 = vsel %vm1672, %v2233, %v2229
    %v2235 = vlaneseq
    %v2236 = vshrl.u32 %v2235, 7
    %v2237 = vsub.s32 %v1674, %v2236
    %v2238 = vrot.slane %v1319, %v2237
    %v2239 = vsel %vm1679, %v2238, %v2234
    %v2240 = vlaneseq
    %v2241 = vshrl.u32 %v2240, 7
    %v2242 = vsub.s32 %v1681, %v2241
    %v2243 = vrot.slane %v1320, %v2242
    %v2244 = vsel %vm1686, %v2243, %v2239
    %v2245 = vlaneseq
    %v2246 = vshrl.u32 %v2245, 7
    %v2247 = vsub.s32 %v1688, %v2246
    %v2248 = vrot.slane %v1321, %v2247
    %v2249 = vsel %vm1693, %v2248, %v2244
    %v2250 = vlaneseq
    %v2251 = vshrl.u32 %v2250, 7
    %v2252 = vsub.s32 %v1695, %v2251
    %v2253 = vrot.slane %v1322, %v2252
    %v2254 = vsel %vm1700, %v2253, %v2249
    %vm2255 = vcmask 1041409
    %v2256 = vsel %vm2255, %v2017, %v1701
    %v2257 = vsel %vm2255, %v2096, %v1780
    %v2258 = vsel %vm2255, %v2175, %v1859
    %v2259 = vsel %vm2255, %v2254, %v1938
    %2264 = vmatprep.subr.mxu0 %v1324
    %2265 = vmatpush1.msra.mxu0 %v1323
    %2266 = vmatprep.subr.mxu0 %v1326
    %2267 = vmatpush1.msra.mxu0 %v1325
    %2268 = vmatprep.subr.mxu0 %v1328
    %2269 = vmatpush1.msra.mxu0 %v1327
    %2270 = vmatprep.subr.mxu0 %v1330
    %2271 = vmatpush1.msra.mxu0 %v1329
    %2272 = vmatprep.subr.mxu0 %v1332
    %2273 = vmatpush1.msra.mxu0 %v1331
    %2274 = vmatprep.subr.mxu0 %v1334
    %2275 = vmatpush1.msra.mxu0 %v1333
    %2276 = vmatprep.subr.mxu0 %v1336
    %2277 = vmatpush1.msra.mxu0 %v1335
    %2278 = vmatprep.subr.mxu0 %v1338
    %2279 = vmatpush1.msra.mxu0 %v1337
    %2280 = vmatprep.subr.mxu0 %v1340
    %2281 = vmatpush1.msra.mxu0 %v1339
    %2282 = vmatprep.subr.mxu0 %v1342
    %2283 = vmatpush1.msra.mxu0 %v1341
    %2284 = vmatprep.subr.mxu0 %v1344
    %2285 = vmatpush1.msra.mxu0 %v1343
    %2286 = vmatprep.subr.mxu0 %v1346
    %2287 = vmatpush1.msra.mxu0 %v1345
    %2288 = vmatprep.subr.mxu0 %v1348
    %2289 = vmatpush1.msra.mxu0 %v1347
    %2290 = vmatprep.subr.mxu0 %v1350
    %2291 = vmatpush1.msra.mxu0 %v1349
    %2292 = vmatprep.subr.mxu0 %v1352
    %2293 = vmatpush1.msra.mxu0 %v1351
    %2294 = vmatprep.subr.mxu0 %v1354
    %2295 = vmatpush1.msra.mxu0 %v1353
    %2296 = vmatprep.subr.mxu0 %v1356
    %2297 = vmatpush1.msra.mxu0 %v1355
    %2298 = vmatprep.subr.mxu0 %v1358
    %2299 = vmatpush1.msra.mxu0 %v1357
    %2300 = vmatprep.subr.mxu0 %v1360
    %2301 = vmatpush1.msra.mxu0 %v1359
    %2302 = vmatprep.subr.mxu0 %v1362
    %2303 = vmatpush1.msra.mxu0 %v1361
    %2304 = vmatprep.subr.mxu0 %v1364
    %2305 = vmatpush1.msra.mxu0 %v1363
    %2306 = vmatprep.subr.mxu0 %v1366
    %2307 = vmatpush1.msra.mxu0 %v1365
    %2308 = vmatprep.subr.mxu0 %v1368
    %2309 = vmatpush1.msra.mxu0 %v1367
    %2310 = vmatprep.subr.mxu0 %v1370
    %2311 = vmatpush1.msra.mxu0 %v1369
    %2312 = vmatprep.subr.mxu0 %v1372
    %2313 = vmatpush1.msra.mxu0 %v1371
    %2314 = vmatprep.subr.mxu0 %v1374
    %2315 = vmatpush1.msra.mxu0 %v1373
    %2316 = vmatprep.subr.mxu0 %v1376
    %2317 = vmatpush1.msra.mxu0 %v1375
    %2318 = vmatprep.subr.mxu0 %v1378
    %2319 = vmatpush1.msra.mxu0 %v1377
    %2320 = vmatprep.subr.mxu0 %v1380
    %2321 = vmatpush1.msra.mxu0 %v1379
    %2322 = vmatprep.subr.mxu0 %v1382
    %2323 = vmatpush1.msra.mxu0 %v1381
    %2324 = vmatprep.subr.mxu0 %v1384
    %2325 = vmatpush1.msra.mxu0 %v1383
    %2326 = vmatprep.subr.mxu0 %v1386
    %2327 = vmatpush1.msra.mxu0 %v1385
    %2328 = vmatprep.mubr.f32.mxu0 %v2257
    %2329 = vmatmul.mubr.f32.gmra.mrb[0].mxu0 %v2256
    %v2330 = vpop.f32.mrb[0].mxu0
    %v2331 = vadd.f32 %v1456, %v2330
    %v2332 = vpop.f32.mrb[0].mxu0
    %v2333 = vadd.f32 %v1460, %v2332
    %2334 = vdwg.mxu0
    %2335 = vmatprep.subr.mxu0 %v1388
    %2336 = vmatpush1.msra.mxu0 %v1387
    %2337 = vmatprep.subr.mxu0 %v1390
    %2338 = vmatpush1.msra.mxu0 %v1389
    %2339 = vmatprep.subr.mxu0 %v1392
    %2340 = vmatpush1.msra.mxu0 %v1391
    %2341 = vmatprep.subr.mxu0 %v1394
    %2342 = vmatpush1.msra.mxu0 %v1393
    %2343 = vmatprep.subr.mxu0 %v1396
    %2344 = vmatpush1.msra.mxu0 %v1395
    %2345 = vmatprep.subr.mxu0 %v1398
    %2346 = vmatpush1.msra.mxu0 %v1397
    %2347 = vmatprep.subr.mxu0 %v1400
    %2348 = vmatpush1.msra.mxu0 %v1399
    %2349 = vmatprep.subr.mxu0 %v1402
    %2350 = vmatpush1.msra.mxu0 %v1401
    %2351 = vmatprep.subr.mxu0 %v1404
    %2352 = vmatpush1.msra.mxu0 %v1403
    %2353 = vmatprep.subr.mxu0 %v1406
    %2354 = vmatpush1.msra.mxu0 %v1405
    %2355 = vmatprep.subr.mxu0 %v1408
    %2356 = vmatpush1.msra.mxu0 %v1407
    %2357 = vmatprep.subr.mxu0 %v1410
    %2358 = vmatpush1.msra.mxu0 %v1409
    %2359 = vmatprep.subr.mxu0 %v1412
    %2360 = vmatpush1.msra.mxu0 %v1411
    %2361 = vmatprep.subr.mxu0 %v1414
    %2362 = vmatpush1.msra.mxu0 %v1413
    %2363 = vmatprep.subr.mxu0 %v1416
    %2364 = vmatpush1.msra.mxu0 %v1415
    %2365 = vmatprep.subr.mxu0 %v1418
    %2366 = vmatpush1.msra.mxu0 %v1417
    %2367 = vmatprep.subr.mxu0 %v1420
    %2368 = vmatpush1.msra.mxu0 %v1419
    %2369 = vmatprep.subr.mxu0 %v1422
    %2370 = vmatpush1.msra.mxu0 %v1421
    %2371 = vmatprep.subr.mxu0 %v1424
    %2372 = vmatpush1.msra.mxu0 %v1423
    %2373 = vmatprep.subr.mxu0 %v1426
    %2374 = vmatpush1.msra.mxu0 %v1425
    %2375 = vmatprep.subr.mxu0 %v1428
    %2376 = vmatpush1.msra.mxu0 %v1427
    %2377 = vmatprep.subr.mxu0 %v1430
    %2378 = vmatpush1.msra.mxu0 %v1429
    %2379 = vmatprep.subr.mxu0 %v1432
    %2380 = vmatpush1.msra.mxu0 %v1431
    %2381 = vmatprep.subr.mxu0 %v1434
    %2382 = vmatpush1.msra.mxu0 %v1433
    %2383 = vmatprep.subr.mxu0 %v1436
    %2384 = vmatpush1.msra.mxu0 %v1435
    %2385 = vmatprep.subr.mxu0 %v1438
    %2386 = vmatpush1.msra.mxu0 %v1437
    %2387 = vmatprep.subr.mxu0 %v1440
    %2388 = vmatpush1.msra.mxu0 %v1439
    %2389 = vmatprep.subr.mxu0 %v1442
    %2390 = vmatpush1.msra.mxu0 %v1441
    %2391 = vmatprep.subr.mxu0 %v1444
    %2392 = vmatpush1.msra.mxu0 %v1443
    %2393 = vmatprep.subr.mxu0 %v1446
    %2394 = vmatpush1.msra.mxu0 %v1445
    %2395 = vmatprep.subr.mxu0 %v1448
    %2396 = vmatpush1.msra.mxu0 %v1447
    %2397 = vmatprep.subr.mxu0 %v1450
    %2398 = vmatpush1.msra.mxu0 %v1449
    %2399 = vmatprep.mubr.f32.mxu0 %v2259
    %2400 = vmatmul.mubr.f32.gmra.mrb[0].mxu0 %v2258
    %v2401 = vpop.f32.mrb[0].mxu0
    %v2402 = vadd.f32 %v2331, %v2401
    %v2403 = vpop.f32.mrb[0].mxu0
    %v2404 = vadd.f32 %v2333, %v2403
    %2405 = vdwg.mxu0
    %v2406 = vmax.f32 %v2402, 0.0
    %v2407 = vmax.f32 %v2404, 0.0
    %v2408 = vld [vmem:[%s3] sm:$0xff]
    %v2409 = vld [vmem:[%s3 + $0x8] sm:$0xff]
    %v2410 = vld [vmem:[%s3 + $0x10] sm:$0xff]
    %v2411 = vld [vmem:[%s3 + $0x18] sm:$0xff]
    %v2412 = vld [vmem:[%s3 + $0x20] sm:$0xff]
    %v2413 = vld [vmem:[%s3 + $0x28] sm:$0xff]
    %v2414 = vld [vmem:[%s3 + $0x30] sm:$0xff]
    %v2415 = vld [vmem:[%s3 + $0x38] sm:$0xff]
    %v2416 = vld [vmem:[%s3 + $0x40] sm:$0xff]
    %v2417 = vld [vmem:[%s3 + $0x48] sm:$0xff]
    %v2418 = vld [vmem:[%s3 + $0x50] sm:$0xff]
    %v2419 = vld [vmem:[%s3 + $0x58] sm:$0xff]
    %v2420 = vld [vmem:[%s3 + $0x60] sm:$0xff]
    %v2421 = vld [vmem:[%s3 + $0x68] sm:$0xff]
    %v2422 = vld [vmem:[%s3 + $0x70] sm:$0xff]
    %v2423 = vld [vmem:[%s3 + $0x78] sm:$0xff]
    %v2424 = vld [vmem:[%s3 + $0x80] sm:$0xff]
    %v2425 = vld [vmem:[%s3 + $0x88] sm:$0xff]
    %v2426 = vld [vmem:[%s3 + $0x90] sm:$0xff]
    %v2427 = vld [vmem:[%s3 + $0x98] sm:$0xff]
    %v2428 = vld [vmem:[%s3 + $0xa0] sm:$0xff]
    %v2429 = vld [vmem:[%s3 + $0xa8] sm:$0xff]
    %v2430 = vld [vmem:[%s3 + $0xb0] sm:$0xff]
    %v2431 = vld [vmem:[%s3 + $0xb8] sm:$0xff]
    %v2432 = vld [vmem:[%s3 + $0xc0] sm:$0xff]
    %v2433 = vld [vmem:[%s3 + $0xc8] sm:$0xff]
    %v2434 = vld [vmem:[%s3 + $0xd0] sm:$0xff]
    %v2435 = vld [vmem:[%s3 + $0xd8] sm:$0xff]
    %v2436 = vld [vmem:[%s3 + $0xe0] sm:$0xff]
    %v2437 = vld [vmem:[%s3 + $0xe8] sm:$0xff]
    %v2438 = vld [vmem:[%s3 + $0xf0] sm:$0xff]
    %v2439 = vld [vmem:[%s3 + $0xf8] sm:$0xff]
    %v2440 = vld [vmem:[%s4] sm:$0x1]
    %v2442 = vlaneseq
    %v2443 = vshrl.u32 %v2442, 7
    %v2444 = vsub.s32 0, %v2443
    %v2445 = vrot.slane %v2440, %v2444
    %2447 = vmatprep.subr.mxu0 0.0
    %2448 = vmatpush1.msra.mxu0 %v2408
    %2449 = vmatprep.subr.mxu0 0.0
    %2450 = vmatpush1.msra.mxu0 %v2409
    %2451 = vmatprep.subr.mxu0 0.0
    %2452 = vmatpush1.msra.mxu0 %v2410
    %2453 = vmatprep.subr.mxu0 0.0
    %2454 = vmatpush1.msra.mxu0 %v2411
    %2455 = vmatprep.subr.mxu0 0.0
    %2456 = vmatpush1.msra.mxu0 %v2412
    %2457 = vmatprep.subr.mxu0 0.0
    %2458 = vmatpush1.msra.mxu0 %v2413
    %2459 = vmatprep.subr.mxu0 0.0
    %2460 = vmatpush1.msra.mxu0 %v2414
    %2461 = vmatprep.subr.mxu0 0.0
    %2462 = vmatpush1.msra.mxu0 %v2415
    %2463 = vmatprep.subr.mxu0 0.0
    %2464 = vmatpush1.msra.mxu0 %v2416
    %2465 = vmatprep.subr.mxu0 0.0
    %2466 = vmatpush1.msra.mxu0 %v2417
    %2467 = vmatprep.subr.mxu0 0.0
    %2468 = vmatpush1.msra.mxu0 %v2418
    %2469 = vmatprep.subr.mxu0 0.0
    %2470 = vmatpush1.msra.mxu0 %v2419
    %2471 = vmatprep.subr.mxu0 0.0
    %2472 = vmatpush1.msra.mxu0 %v2420
    %2473 = vmatprep.subr.mxu0 0.0
    %2474 = vmatpush1.msra.mxu0 %v2421
    %2475 = vmatprep.subr.mxu0 0.0
    %2476 = vmatpush1.msra.mxu0 %v2422
    %2477 = vmatprep.subr.mxu0 0.0
    %2478 = vmatpush1.msra.mxu0 %v2423
    %2479 = vmatprep.subr.mxu0 0.0
    %2480 = vmatpush1.msra.mxu0 %v2424
    %2481 = vmatprep.subr.mxu0 0.0
    %2482 = vmatpush1.msra.mxu0 %v2425
    %2483 = vmatprep.subr.mxu0 0.0
    %2484 = vmatpush1.msra.mxu0 %v2426
    %2485 = vmatprep.subr.mxu0 0.0
    %2486 = vmatpush1.msra.mxu0 %v2427
    %2487 = vmatprep.subr.mxu0 0.0
    %2488 = vmatpush1.msra.mxu0 %v2428
    %2489 = vmatprep.subr.mxu0 0.0
    %2490 = vmatpush1.msra.mxu0 %v2429
    %2491 = vmatprep.subr.mxu0 0.0
    %2492 = vmatpush1.msra.mxu0 %v2430
    %2493 = vmatprep.subr.mxu0 0.0
    %2494 = vmatpush1.msra.mxu0 %v2431
    %2495 = vmatprep.subr.mxu0 0.0
    %2496 = vmatpush1.msra.mxu0 %v2432
    %2497 = vmatprep.subr.mxu0 0.0
    %2498 = vmatpush1.msra.mxu0 %v2433
    %2499 = vmatprep.subr.mxu0 0.0
    %2500 = vmatpush1.msra.mxu0 %v2434
    %2501 = vmatprep.subr.mxu0 0.0
    %2502 = vmatpush1.msra.mxu0 %v2435
    %2503 = vmatprep.subr.mxu0 0.0
    %2504 = vmatpush1.msra.mxu0 %v2436
    %2505 = vmatprep.subr.mxu0 0.0
    %2506 = vmatpush1.msra.mxu0 %v2437
    %2507 = vmatprep.subr.mxu0 0.0
    %2508 = vmatpush1.msra.mxu0 %v2438
    %2509 = vmatprep.subr.mxu0 0.0
    %2510 = vmatpush1.msra.mxu0 %v2439
    %2511 = vmatprep.mubr.f32.mxu0 %v2407
    %2512 = vmatmul.mubr.f32.gmra.mrb[0].mxu0 %v2406
    %v2513 = vpop.f32.mrb[0].mxu0
    %v2514 = vadd.f32 %v2445, %v2513
    %v2515 = vpop.f32.mrb[0].mxu0
    %2516 = vdwg.mxu0
    %v2517 = vmax.f32 %v2514, 0.0
    %v2518 = vld [vmem:[%s5] sm:$0xff]
    %v2519 = vld [vmem:[%s5 + $0x8] sm:$0xff]
    %v2520 = vld [vmem:[%s5 + $0x10] sm:$0xff]
    %v2521 = vld [vmem:[%s5 + $0x18] sm:$0xff]
    %v2522 = vld [vmem:[%s5 + $0x20] sm:$0xff]
    %v2523 = vld [vmem:[%s5 + $0x28] sm:$0xff]
    %v2524 = vld [vmem:[%s5 + $0x30] sm:$0xff]
    %v2525 = vld [vmem:[%s5 + $0x38] sm:$0xff]
    %v2526 = vld [vmem:[%s5 + $0x40] sm:$0xff]
    %v2527 = vld [vmem:[%s5 + $0x48] sm:$0xff]
    %v2528 = vld [vmem:[%s5 + $0x50] sm:$0xff]
    %v2529 = vld [vmem:[%s5 + $0x58] sm:$0xff]
    %v2530 = vld [vmem:[%s5 + $0x60] sm:$0xff]
    %v2531 = vld [vmem:[%s5 + $0x68] sm:$0xff]
    %v2532 = vld [vmem:[%s5 + $0x70] sm:$0xff]
    %v2533 = vld [vmem:[%s5 + $0x78] sm:$0xff]
    %v2534 = vld [vmem:[%s6] sm:$0x1]
    %v2536 = vlaneseq
    %v2537 = vshrl.u32 %v2536, 7
    %v2538 = vsub.s32 0, %v2537
    %v2539 = vrot.slane %v2534, %v2538
    %2541 = vmatprep.subr.mxu0 0.0
    %2542 = vmatpush1.msra.mxu0 %v2518
    %2543 = vmatprep.subr.mxu0 0.0
    %2544 = vmatpush1.msra.mxu0 %v2519
    %2545 = vmatprep.subr.mxu0 0.0
    %2546 = vmatpush1.msra.mxu0 %v2520
    %2547 = vmatprep.subr.mxu0 0.0
    %2548 = vmatpush1.msra.mxu0 %v2521
    %2549 = vmatprep.subr.mxu0 0.0
    %2550 = vmatpush1.msra.mxu0 %v2522
    %2551 = vmatprep.subr.mxu0 0.0
    %2552 = vmatpush1.msra.mxu0 %v2523
    %2553 = vmatprep.subr.mxu0 0.0
    %2554 = vmatpush1.msra.mxu0 %v2524
    %2555 = vmatprep.subr.mxu0 0.0
    %2556 = vmatpush1.msra.mxu0 %v2525
    %2557 = vmatprep.subr.mxu0 0.0
    %2558 = vmatpush1.msra.mxu0 %v2526
    %2559 = vmatprep.subr.mxu0 0.0
    %2560 = vmatpush1.msra.mxu0 %v2527
    %2561 = vmatprep.subr.mxu0 0.0
    %2562 = vmatpush1.msra.mxu0 %v2528
    %2563 = vmatprep.subr.mxu0 0.0
    %2564 = vmatpush1.msra.mxu0 %v2529
    %2565 = vmatprep.subr.mxu0 0.0
    %2566 = vmatpush1.msra.mxu0 %v2530
    %2567 = vmatprep.subr.mxu0 0.0
    %2568 = vmatpush1.msra.mxu0 %v2531
    %2569 = vmatprep.subr.mxu0 0.0
    %2570 = vmatpush1.msra.mxu0 %v2532
    %2571 = vmatprep.subr.mxu0 0.0
    %2572 = vmatpush1.msra.mxu0 %v2533
    %2573 = vmatprep.subr.mxu0 0.0
    %2574 = vmatpush1.msra.mxu0 0.0
    %2575 = vmatprep.subr.mxu0 0.0
    %2576 = vmatpush1.msra.mxu0 0.0
    %2577 = vmatprep.subr.mxu0 0.0
    %2578 = vmatpush1.msra.mxu0 0.0
    %2579 = vmatprep.subr.mxu0 0.0
    %2580 = vmatpush1.msra.mxu0 0.0
    %2581 = vmatprep.subr.mxu0 0.0
    %2582 = vmatpush1.msra.mxu0 0.0
    %2583 = vmatprep.subr.mxu0 0.0
    %2584 = vmatpush1.msra.mxu0 0.0
    %2585 = vmatprep.subr.mxu0 0.0
    %2586 = vmatpush1.msra.mxu0 0.0
    %2587 = vmatprep.subr.mxu0 0.0
    %2588 = vmatpush1.msra.mxu0 0.0
    %2589 = vmatprep.subr.mxu0 0.0
    %2590 = vmatpush1.msra.mxu0 0.0
    %2591 = vmatprep.subr.mxu0 0.0
    %2592 = vmatpush1.msra.mxu0 0.0
    %2593 = vmatprep.subr.mxu0 0.0
    %2594 = vmatpush1.msra.mxu0 0.0
    %2595 = vmatprep.subr.mxu0 0.0
    %2596 = vmatpush1.msra.mxu0 0.0
    %2597 = vmatprep.subr.mxu0 0.0
    %2598 = vmatpush1.msra.mxu0 0.0
    %2599 = vmatprep.subr.mxu0 0.0
    %2600 = vmatpush1.msra.mxu0 0.0
    %2601 = vmatprep.subr.mxu0 0.0
    %2602 = vmatpush1.msra.mxu0 0.0
    %2603 = vmatprep.subr.mxu0 0.0
    %2604 = vmatpush1.msra.mxu0 0.0
    %2605 = vmatprep.mubr.f32.mxu0 0.0
    %2606 = vmatmul.mubr.f32.gmra.mrb[0].mxu0 %v2517
    %v2607 = vpop.f32.mrb[0].mxu0
    %v2608 = vadd.f32 %v2539, %v2607
    %v2609 = vpop.f32.mrb[0].mxu0
    %2610 = vdwg.mxu0
    %v2611 = vmax.f32 %v2608, 0.0
    %v2612 = vld [vmem:[%s7] sm:$0xff]
    %v2613 = vld [vmem:[%s7 + $0x8] sm:$0xff]
    %v2614 = vld [vmem:[%s7 + $0x10] sm:$0xff]
    %v2615 = vld [vmem:[%s7 + $0x18] sm:$0xff]
    %v2616 = vld [vmem:[%s7 + $0x20] sm:$0xff]
    %v2617 = vld [vmem:[%s7 + $0x28] sm:$0xff]
    %v2618 = vld [vmem:[%s7 + $0x30] sm:$0xff]
    %v2619 = vld [vmem:[%s7 + $0x38] sm:$0xff]
    %v2620 = vld [vmem:[#allocation3] sm:$0x1]
    %v2622 = vlaneseq
    %v2623 = vshrl.u32 %v2622, 7
    %v2624 = vsub.s32 0, %v2623
    %v2625 = vrot.slane %v2620, %v2624
    %vm2627 = vcmask 523264
    %v2629 = vsel %vm2627, %v2611, 0
    %2631 = vmatprep.subr.mxu0 0.0
    %2632 = vmatpush1.msra.mxu0 %v2612
    %2633 = vmatprep.subr.mxu0 0.0
    %2634 = vmatpush1.msra.mxu0 %v2613
    %2635 = vmatprep.subr.mxu0 0.0
    %2636 = vmatpush1.msra.mxu0 %v2614
    %2637 = vmatprep.subr.mxu0 0.0
    %2638 = vmatpush1.msra.mxu0 %v2615
    %2639 = vmatprep.subr.mxu0 0.0
    %2640 = vmatpush1.msra.mxu0 %v2616
    %2641 = vmatprep.subr.mxu0 0.0
    %2642 = vmatpush1.msra.mxu0 %v2617
    %2643 = vmatprep.subr.mxu0 0.0
    %2644 = vmatpush1.msra.mxu0 %v2618
    %2645 = vmatprep.subr.mxu0 0.0
    %2646 = vmatpush1.msra.mxu0 %v2619
    %2647 = vmatprep.subr.mxu0 0.0
    %2648 = vmatpush1.msra.mxu0 0.0
    %2649 = vmatprep.subr.mxu0 0.0
    %2650 = vmatpush1.msra.mxu0 0.0
    %2651 = vmatprep.subr.mxu0 0.0
    %2652 = vmatpush1.msra.mxu0 0.0
    %2653 = vmatprep.subr.mxu0 0.0
    %2654 = vmatpush1.msra.mxu0 0.0
    %2655 = vmatprep.subr.mxu0 0.0
    %2656 = vmatpush1.msra.mxu0 0.0
    %2657 = vmatprep.subr.mxu0 0.0
    %2658 = vmatpush1.msra.mxu0 0.0
    %2659 = vmatprep.subr.mxu0 0.0
    %2660 = vmatpush1.msra.mxu0 0.0
    %2661 = vmatprep.subr.mxu0 0.0
    %2662 = vmatpush1.msra.mxu0 0.0
    %2663 = vmatprep.subr.mxu0 0.0
    %2664 = vmatpush1.msra.mxu0 0.0
    %2665 = vmatprep.subr.mxu0 0.0
    %2666 = vmatpush1.msra.mxu0 0.0
    %2667 = vmatprep.subr.mxu0 0.0
    %2668 = vmatpush1.msra.mxu0 0.0
    %2669 = vmatprep.subr.mxu0 0.0
    %2670 = vmatpush1.msra.mxu0 0.0
    %2671 = vmatprep.subr.mxu0 0.0
    %2672 = vmatpush1.msra.mxu0 0.0
    %2673 = vmatprep.subr.mxu0 0.0
    %2674 = vmatpush1.msra.mxu0 0.0
    %2675 = vmatprep.subr.mxu0 0.0
    %2676 = vmatpush1.msra.mxu0 0.0
    %2677 = vmatprep.subr.mxu0 0.0
    %2678 = vmatpush1.msra.mxu0 0.0
    %2679 = vmatprep.subr.mxu0 0.0
    %2680 = vmatpush1.msra.mxu0 0.0
    %2681 = vmatprep.subr.mxu0 0.0
    %2682 = vmatpush1.msra.mxu0 0.0
    %2683 = vmatprep.subr.mxu0 0.0
    %2684 = vmatpush1.msra.mxu0 0.0
    %2685 = vmatprep.subr.mxu0 0.0
    %2686 = vmatpush1.msra.mxu0 0.0
    %2687 = vmatprep.subr.mxu0 0.0
    %2688 = vmatpush1.msra.mxu0 0.0
    %2689 = vmatprep.subr.mxu0 0.0
    %2690 = vmatpush1.msra.mxu0 0.0
    %2691 = vmatprep.subr.mxu0 0.0
    %2692 = vmatpush1.msra.mxu0 0.0
    %2693 = vmatprep.subr.mxu0 0.0
    %2694 = vmatpush1.msra.mxu0 0.0
    %2695 = vmatprep.mubr.f32.mxu0 0.0
    %2696 = vmatmul.mubr.f32.gmra.mrb[0].mxu0 %v2629
    %v2697 = vpop.f32.mrb[0].mxu0
    %v2698 = vadd.f32 %v2625, %v2697
    %v2699 = vpop.f32.mrb[0].mxu0
    %2700 = vdwg.mxu0
    %vm2701 = vcmask 1024
    %2702 = vst.msk [vmem:[%s9] sm:$0x3] %vm2701, %v2698
  $region45: #{tpu_custom_call.1} parent=0 // pred_fallthru
    _
  // Predicated region
  $region46: #{tpu_custom_call.1} parent=0 // pred_check
    _
  $region47: #{tpu_custom_call.1} parent=0 // pred_check_branch
    %2704 = sbr.rel (0) target = $region49
  $region48: #{tpu_custom_call.1} parent=0 // pred_region
    _
  $region49: #{tpu_custom_call.1} parent=0 // pred_fallthru
    _
  // Predicated region
  $region50: #{tpu_custom_call.1} parent=0 // pred_check
    _
  $region51: #{tpu_custom_call.1} parent=0 // pred_check_branch
    %2706 = sbr.rel (0) target = $region53
  $region52: #{tpu_custom_call.1} parent=0 // pred_region
    _
  $region53: #{tpu_custom_call.1} parent=0 // pred_fallthru
    _

</llo_original>
